<compile_context>
chip_gen: v7x
topology: tpu7x:2x2x1
jax: 0.10.0
libtpu: 0.0.40
codegen_flags: <defaults>
</compile_context>

<pallas_src>
import functools

import jax
import jax.numpy as jnp
from jax.experimental import pallas as pl
from jax.experimental.pallas import tpu as pltpu


def fnn_recurrent_kernel(u2_ref, w0s_ref, w0f_ref, b0_ref, w1_ref, b1_ref,
                         w2_ref, b2_ref, y_ref, *, T, B, compute_dtype):
    """Whole recurrence in one kernel invocation (all operands VMEM-resident).

    u2_ref : (T*B, D_in)       inputs, flattened over (time, batch)
    w0s_ref: (D_out, H0)       recurrent-state rows of layer-0 weight (w0[:D_out])
    w0f_ref: (D_in, H0)        layer-0 weight with its first D_out rows zeroed,
                               so u @ w0f == u[:, D_out:] @ w0[D_out:]
    b*_ref : (1, fan_out)      biases
    y_ref  : ((T+1)*B, D_out)  outputs, flattened over (time, batch)
    """
    d_out = y_ref.shape[1]
    h1_dim = b1_ref.shape[1]

    # ---------------- prologue: everything OFF the serial chain ------------
    u2 = u2_ref[...]
    w0s = w0s_ref[...]
    w1 = w1_ref[...].astype(compute_dtype)
    w2 = w2_ref[...]
    b2 = b2_ref[...]

    # Fuse layer-2 into the recurrent layer-0 term (tiny matmuls, off chain).
    w20 = jnp.dot(w2, w0s, preferred_element_type=jnp.float32).astype(compute_dtype)
    b20 = jnp.dot(b2, w0s, preferred_element_type=jnp.float32)          # (1, H0)

    # State-independent feedthrough for ALL steps in one batched matmul.
    pre = jnp.dot(u2.astype(compute_dtype), w0f_ref[...].astype(compute_dtype),
                  preferred_element_type=jnp.float32) + b0_ref[...]     # (T*B, H0)

    # Step 0's layer-0 pre-activation is fully input-determined.
    y0 = u2[:B, :d_out]                                                 # u[0, :, :D_out]
    z0 = jnp.dot(y0, w0s, preferred_element_type=jnp.float32) + pre[:B]

    # Fold b20 into the recurrent steps' feedthrough (keeps it off the chain).
    pre_rec = pre[B:] + b20                                             # ((T-1)*B, H0)

    # Hoist the loop-invariant bias broadcast out of the unrolled loop.
    b1b = jnp.broadcast_to(b1_ref[...], (B, h1_dim))

    # -------- serial chain: exactly 2 chained MXU matmuls per step ---------
    h0 = jnp.maximum(z0, 0.0)                                           # ReLU (linear == 0)
    h1 = jnp.maximum(
        jnp.dot(h0.astype(compute_dtype), w1,
                preferred_element_type=jnp.float32) + b1b, 0.0)
    h1_steps = [h1]
    for j in range(1, T):                                               # fully unrolled (T static, small)
        z0 = jnp.dot(h1.astype(compute_dtype), w20,
                     preferred_element_type=jnp.float32) + pre_rec[(j - 1) * B:j * B]
        h0 = jnp.maximum(z0, 0.0)
        h1 = jnp.maximum(
            jnp.dot(h0.astype(compute_dtype), w1,
                    preferred_element_type=jnp.float32) + b1b, 0.0)
        h1_steps.append(h1)

    # -------- epilogue: one batched output matmul + contiguous stores ------
    h1_all = jnp.concatenate(h1_steps, axis=0)                          # (T*B, H1)
    y_out = jnp.dot(h1_all, w2, preferred_element_type=jnp.float32) + b2
    y_ref[:B, :] = y0
    y_ref[B:, :] = y_out


def model_fnn_forward(u, params, *, mxu_bf16=False):
    """u: (T, B, D_in) float32; params = (w0, b0, w1, b1, w2, b2) with
    w*: (fan_in, fan_out), b*: (1, fan_out).  Returns (T+1, B, D_out) float32.

    mxu_bf16=True casts the matmul OPERANDS on the recurrent chain to
    bfloat16 (accumulation and all elementwise math stay f32) — shortens the
    chained MXU latency on bf16-native MXUs (v6e/v7x) at a small precision
    cost.  Default False preserves the f32 semantics of the module.
    """
    w0, b0, w1, b1, w2, b2 = params
    T, B, d_in = u.shape
    d_out = w2.shape[1]
    assert d_in >= d_out, "model_FNN requires input_num >= output_num"

    # Split layer 0: recurrent-state rows vs. input feedthrough (state rows
    # zeroed) so the kernel never slices u along lanes inside the loop.
    w0_state = w0[:d_out]                   # (D_out, H0)
    w0_feed = w0.at[:d_out].set(0.0)        # (D_in,  H0)

    u2 = u.reshape(T * B, d_in)             # free reshape in HBM

    kernel = functools.partial(
        fnn_recurrent_kernel, T=T, B=B,
        compute_dtype=jnp.bfloat16 if mxu_bf16 else jnp.float32)

    vmem = pl.BlockSpec(memory_space=pltpu.MemorySpace.VMEM)
    # Single invocation, no grid: all operands fit in VMEM (~20 KiB) on every
    # generation; a grid would only add ~0.35 us/step of pure overhead here.
    y2 = pl.pallas_call(
        kernel,
        out_shape=jax.ShapeDtypeStruct(((T + 1) * B, d_out), jnp.float32),
        in_specs=[vmem] * 8,
        out_specs=vmem,
    )(u2, w0_state, w0_feed, b0, w1, b1, w2, b2)
    return y2.reshape(T + 1, B, d_out)


if __name__ == "__main__":
    # Small shapes consistent with the module: seq T=8, batch B=8,
    # input_num=16, hidden_units=(32, 32), output_num=8, linear=0 (ReLU).
    T, B = 8, 8
    input_num, hidden_units, output_num = 16, (32, 32), 8

    key = jax.random.PRNGKey(0)
    keys = jax.random.split(key, 7)

    def init_linear(kw, kb, fan_in, fan_out):
        # Mimic torch.nn.Linear default init: U(-1/sqrt(fan_in), 1/sqrt(fan_in)).
        bound = fan_in ** -0.5
        w = jax.random.uniform(kw, (fan_in, fan_out), jnp.float32, -bound, bound)
        b = jax.random.uniform(kb, (1, fan_out), jnp.float32, -bound, bound)
        return w, b

    w0, b0 = init_linear(keys[0], keys[1], input_num, hidden_units[0])
    w1, b1 = init_linear(keys[2], keys[3], hidden_units[0], hidden_units[1])
    w2, b2 = init_linear(keys[4], keys[5], hidden_units[1], output_num)
    u = jax.random.normal(keys[6], (T, B, input_num), jnp.float32)
    params = (w0, b0, w1, b1, w2, b2)

    fwd_f32 = jax.jit(functools.partial(model_fnn_forward, mxu_bf16=False))
    fwd_bf16 = jax.jit(functools.partial(model_fnn_forward, mxu_bf16=True))

    y = jax.block_until_ready(fwd_f32(u, params))
    y_bf16 = jax.block_until_ready(fwd_bf16(u, params))

    # Pure-JAX reference of the PyTorch forward for a sanity check.
    def ref_forward(u):
        def net(x):
            h = jnp.maximum(x @ w0 + b0, 0.0)
            h = jnp.maximum(h @ w1 + b1, 0.0)
            return h @ w2 + b2

        state = u[0, :, :output_num]
        ys = [state]
        for j in range(T):
            x = jnp.concatenate([state, u[j, :, output_num:]], axis=-1)
            state = net(x)
            ys.append(state)
        return jnp.stack(ys, axis=0)

    y_ref = ref_forward(u)
    assert y.shape == (T + 1, B, output_num)
    # f32 path: differences vs. reference come only from op-reordering (w2@w0
    # pre-fusion / batched epilogue).
    assert jnp.allclose(y, y_ref, atol=1e-4, rtol=1e-4)
    # bf16-operand path (v6e/v7x fast MXU path): bf16 rounding on the chain.
    assert jnp.allclose(y_bf16, y_ref, atol=5e-2, rtol=5e-2)
    print("KERNEL_OK")
</pallas_src>

<mosaic_0001>
module attributes {stable_mosaic.version = 11 : i64} {
  func.func @fnn_recurrent_kernel(%arg0: memref<64x16xf32, #tpu.memory_space<vmem>>, %arg1: memref<8x32xf32, #tpu.memory_space<vmem>>, %arg2: memref<16x32xf32, #tpu.memory_space<vmem>>, %arg3: memref<1x32xf32, #tpu.memory_space<vmem>>, %arg4: memref<32x32xf32, #tpu.memory_space<vmem>>, %arg5: memref<1x32xf32, #tpu.memory_space<vmem>>, %arg6: memref<32x8xf32, #tpu.memory_space<vmem>>, %arg7: memref<1x8xf32, #tpu.memory_space<vmem>>, %arg8: memref<72x8xf32, #tpu.memory_space<vmem>>) attributes {dimension_semantics = [], scalar_prefetch = 0 : i64, scratch_operands = 0 : i64, tpu.core_type = #tpu.core_type<tc>} {
    %c0 = arith.constant 0 : index
    %c0_0 = arith.constant 0 : index
    %0 = vector.load %arg0[%c0, %c0_0] : memref<64x16xf32, #tpu.memory_space<vmem>>, vector<64x16xf32>
    %c0_1 = arith.constant 0 : index
    %c0_2 = arith.constant 0 : index
    %1 = vector.load %arg1[%c0_1, %c0_2] : memref<8x32xf32, #tpu.memory_space<vmem>>, vector<8x32xf32>
    %c0_3 = arith.constant 0 : index
    %c0_4 = arith.constant 0 : index
    %2 = vector.load %arg4[%c0_3, %c0_4] : memref<32x32xf32, #tpu.memory_space<vmem>>, vector<32x32xf32>
    %c0_5 = arith.constant 0 : index
    %c0_6 = arith.constant 0 : index
    %3 = vector.load %arg6[%c0_5, %c0_6] : memref<32x8xf32, #tpu.memory_space<vmem>>, vector<32x8xf32>
    %c0_7 = arith.constant 0 : index
    %c0_8 = arith.constant 0 : index
    %4 = vector.load %arg7[%c0_7, %c0_8] : memref<1x8xf32, #tpu.memory_space<vmem>>, vector<1x8xf32>
    %cst = arith.constant dense<0.000000e+00> : vector<32x32xf32>
    %5 = tpu.matmul %3, %1, %cst {dimension_numbers = #tpu.dot_dimension_numbers<[1], [0], [0], [1], [0, 0, 1, 1], [], []>} : vector<32x8xf32>, vector<8x32xf32>, vector<32x32xf32> -> vector<32x32xf32>
    %cst_9 = arith.constant dense<0.000000e+00> : vector<1x32xf32>
    %6 = tpu.matmul %4, %1, %cst_9 {dimension_numbers = #tpu.dot_dimension_numbers<[1], [0], [0], [1], [0, 0, 1, 1], [], []>} : vector<1x8xf32>, vector<8x32xf32>, vector<1x32xf32> -> vector<1x32xf32>
    %c0_10 = arith.constant 0 : index
    %c0_11 = arith.constant 0 : index
    %7 = vector.load %arg2[%c0_10, %c0_11] : memref<16x32xf32, #tpu.memory_space<vmem>>, vector<16x32xf32>
    %cst_12 = arith.constant dense<0.000000e+00> : vector<64x32xf32>
    %8 = tpu.matmul %0, %7, %cst_12 {dimension_numbers = #tpu.dot_dimension_numbers<[1], [0], [0], [1], [0, 0, 1, 1], [], []>} : vector<64x16xf32>, vector<16x32xf32>, vector<64x32xf32> -> vector<64x32xf32>
    %c0_13 = arith.constant 0 : index
    %c0_14 = arith.constant 0 : index
    %9 = vector.load %arg3[%c0_13, %c0_14] : memref<1x32xf32, #tpu.memory_space<vmem>>, vector<1x32xf32>
    %10 = vector.broadcast %9 : vector<1x32xf32> to vector<64x32xf32>
    %11 = arith.addf %8, %10 : vector<64x32xf32>
    %12 = vector.extract_strided_slice %0 {offsets = [0, 0], sizes = [8, 8], strides = [1, 1]} : vector<64x16xf32> to vector<8x8xf32>
    %cst_15 = arith.constant dense<0.000000e+00> : vector<8x32xf32>
    %13 = tpu.matmul %12, %1, %cst_15 {dimension_numbers = #tpu.dot_dimension_numbers<[1], [0], [0], [1], [0, 0, 1, 1], [], []>} : vector<8x8xf32>, vector<8x32xf32>, vector<8x32xf32> -> vector<8x32xf32>
    %14 = vector.extract_strided_slice %11 {offsets = [0, 0], sizes = [8, 32], strides = [1, 1]} : vector<64x32xf32> to vector<8x32xf32>
    %15 = arith.addf %13, %14 : vector<8x32xf32>
    %16 = vector.extract_strided_slice %11 {offsets = [8, 0], sizes = [56, 32], strides = [1, 1]} : vector<64x32xf32> to vector<56x32xf32>
    %17 = vector.broadcast %6 : vector<1x32xf32> to vector<56x32xf32>
    %18 = arith.addf %16, %17 : vector<56x32xf32>
    %c0_16 = arith.constant 0 : index
    %c0_17 = arith.constant 0 : index
    %19 = vector.load %arg5[%c0_16, %c0_17] : memref<1x32xf32, #tpu.memory_space<vmem>>, vector<1x32xf32>
    %20 = vector.shape_cast %19 : vector<1x32xf32> to vector<1x32xf32>
    %21 = vector.broadcast %20 : vector<1x32xf32> to vector<8x32xf32>
    %cst_18 = arith.constant 0.000000e+00 : f32
    %22 = vector.broadcast %cst_18 : f32 to vector<8x32xf32>
    %23 = arith.maximumf %15, %22 : vector<8x32xf32>
    %cst_19 = arith.constant dense<0.000000e+00> : vector<8x32xf32>
    %24 = tpu.matmul %23, %2, %cst_19 {dimension_numbers = #tpu.dot_dimension_numbers<[1], [0], [0], [1], [0, 0, 1, 1], [], []>} : vector<8x32xf32>, vector<32x32xf32>, vector<8x32xf32> -> vector<8x32xf32>
    %25 = arith.addf %24, %21 : vector<8x32xf32>
    %cst_20 = arith.constant 0.000000e+00 : f32
    %26 = vector.broadcast %cst_20 : f32 to vector<8x32xf32>
    %27 = arith.maximumf %25, %26 : vector<8x32xf32>
    %cst_21 = arith.constant dense<0.000000e+00> : vector<8x32xf32>
    %28 = tpu.matmul %27, %5, %cst_21 {dimension_numbers = #tpu.dot_dimension_numbers<[1], [0], [0], [1], [0, 0, 1, 1], [], []>} : vector<8x32xf32>, vector<32x32xf32>, vector<8x32xf32> -> vector<8x32xf32>
    %29 = vector.extract_strided_slice %18 {offsets = [0, 0], sizes = [8, 32], strides = [1, 1]} : vector<56x32xf32> to vector<8x32xf32>
    %30 = arith.addf %28, %29 : vector<8x32xf32>
    %cst_22 = arith.constant 0.000000e+00 : f32
    %31 = vector.broadcast %cst_22 : f32 to vector<8x32xf32>
    %32 = arith.maximumf %30, %31 : vector<8x32xf32>
    %cst_23 = arith.constant dense<0.000000e+00> : vector<8x32xf32>
    %33 = tpu.matmul %32, %2, %cst_23 {dimension_numbers = #tpu.dot_dimension_numbers<[1], [0], [0], [1], [0, 0, 1, 1], [], []>} : vector<8x32xf32>, vector<32x32xf32>, vector<8x32xf32> -> vector<8x32xf32>
    %34 = arith.addf %33, %21 : vector<8x32xf32>
    %cst_24 = arith.constant 0.000000e+00 : f32
    %35 = vector.broadcast %cst_24 : f32 to vector<8x32xf32>
    %36 = arith.maximumf %34, %35 : vector<8x32xf32>
    %cst_25 = arith.constant dense<0.000000e+00> : vector<8x32xf32>
    %37 = tpu.matmul %36, %5, %cst_25 {dimension_numbers = #tpu.dot_dimension_numbers<[1], [0], [0], [1], [0, 0, 1, 1], [], []>} : vector<8x32xf32>, vector<32x32xf32>, vector<8x32xf32> -> vector<8x32xf32>
    %38 = vector.extract_strided_slice %18 {offsets = [8, 0], sizes = [8, 32], strides = [1, 1]} : vector<56x32xf32> to vector<8x32xf32>
    %39 = arith.addf %37, %38 : vector<8x32xf32>
    %cst_26 = arith.constant 0.000000e+00 : f32
    %40 = vector.broadcast %cst_26 : f32 to vector<8x32xf32>
    %41 = arith.maximumf %39, %40 : vector<8x32xf32>
    %cst_27 = arith.constant dense<0.000000e+00> : vector<8x32xf32>
    %42 = tpu.matmul %41, %2, %cst_27 {dimension_numbers = #tpu.dot_dimension_numbers<[1], [0], [0], [1], [0, 0, 1, 1], [], []>} : vector<8x32xf32>, vector<32x32xf32>, vector<8x32xf32> -> vector<8x32xf32>
    %43 = arith.addf %42, %21 : vector<8x32xf32>
    %cst_28 = arith.constant 0.000000e+00 : f32
    %44 = vector.broadcast %cst_28 : f32 to vector<8x32xf32>
    %45 = arith.maximumf %43, %44 : vector<8x32xf32>
    %cst_29 = arith.constant dense<0.000000e+00> : vector<8x32xf32>
    %46 = tpu.matmul %45, %5, %cst_29 {dimension_numbers = #tpu.dot_dimension_numbers<[1], [0], [0], [1], [0, 0, 1, 1], [], []>} : vector<8x32xf32>, vector<32x32xf32>, vector<8x32xf32> -> vector<8x32xf32>
    %47 = vector.extract_strided_slice %18 {offsets = [16, 0], sizes = [8, 32], strides = [1, 1]} : vector<56x32xf32> to vector<8x32xf32>
    %48 = arith.addf %46, %47 : vector<8x32xf32>
    %cst_30 = arith.constant 0.000000e+00 : f32
    %49 = vector.broadcast %cst_30 : f32 to vector<8x32xf32>
    %50 = arith.maximumf %48, %49 : vector<8x32xf32>
    %cst_31 = arith.constant dense<0.000000e+00> : vector<8x32xf32>
    %51 = tpu.matmul %50, %2, %cst_31 {dimension_numbers = #tpu.dot_dimension_numbers<[1], [0], [0], [1], [0, 0, 1, 1], [], []>} : vector<8x32xf32>, vector<32x32xf32>, vector<8x32xf32> -> vector<8x32xf32>
    %52 = arith.addf %51, %21 : vector<8x32xf32>
    %cst_32 = arith.constant 0.000000e+00 : f32
    %53 = vector.broadcast %cst_32 : f32 to vector<8x32xf32>
    %54 = arith.maximumf %52, %53 : vector<8x32xf32>
    %cst_33 = arith.constant dense<0.000000e+00> : vector<8x32xf32>
    %55 = tpu.matmul %54, %5, %cst_33 {dimension_numbers = #tpu.dot_dimension_numbers<[1], [0], [0], [1], [0, 0, 1, 1], [], []>} : vector<8x32xf32>, vector<32x32xf32>, vector<8x32xf32> -> vector<8x32xf32>
    %56 = vector.extract_strided_slice %18 {offsets = [24, 0], sizes = [8, 32], strides = [1, 1]} : vector<56x32xf32> to vector<8x32xf32>
    %57 = arith.addf %55, %56 : vector<8x32xf32>
    %cst_34 = arith.constant 0.000000e+00 : f32
    %58 = vector.broadcast %cst_34 : f32 to vector<8x32xf32>
    %59 = arith.maximumf %57, %58 : vector<8x32xf32>
    %cst_35 = arith.constant dense<0.000000e+00> : vector<8x32xf32>
    %60 = tpu.matmul %59, %2, %cst_35 {dimension_numbers = #tpu.dot_dimension_numbers<[1], [0], [0], [1], [0, 0, 1, 1], [], []>} : vector<8x32xf32>, vector<32x32xf32>, vector<8x32xf32> -> vector<8x32xf32>
    %61 = arith.addf %60, %21 : vector<8x32xf32>
    %cst_36 = arith.constant 0.000000e+00 : f32
    %62 = vector.broadcast %cst_36 : f32 to vector<8x32xf32>
    %63 = arith.maximumf %61, %62 : vector<8x32xf32>
    %cst_37 = arith.constant dense<0.000000e+00> : vector<8x32xf32>
    %64 = tpu.matmul %63, %5, %cst_37 {dimension_numbers = #tpu.dot_dimension_numbers<[1], [0], [0], [1], [0, 0, 1, 1], [], []>} : vector<8x32xf32>, vector<32x32xf32>, vector<8x32xf32> -> vector<8x32xf32>
    %65 = vector.extract_strided_slice %18 {offsets = [32, 0], sizes = [8, 32], strides = [1, 1]} : vector<56x32xf32> to vector<8x32xf32>
    %66 = arith.addf %64, %65 : vector<8x32xf32>
    %cst_38 = arith.constant 0.000000e+00 : f32
    %67 = vector.broadcast %cst_38 : f32 to vector<8x32xf32>
    %68 = arith.maximumf %66, %67 : vector<8x32xf32>
    %cst_39 = arith.constant dense<0.000000e+00> : vector<8x32xf32>
    %69 = tpu.matmul %68, %2, %cst_39 {dimension_numbers = #tpu.dot_dimension_numbers<[1], [0], [0], [1], [0, 0, 1, 1], [], []>} : vector<8x32xf32>, vector<32x32xf32>, vector<8x32xf32> -> vector<8x32xf32>
    %70 = arith.addf %69, %21 : vector<8x32xf32>
    %cst_40 = arith.constant 0.000000e+00 : f32
    %71 = vector.broadcast %cst_40 : f32 to vector<8x32xf32>
    %72 = arith.maximumf %70, %71 : vector<8x32xf32>
    %cst_41 = arith.constant dense<0.000000e+00> : vector<8x32xf32>
    %73 = tpu.matmul %72, %5, %cst_41 {dimension_numbers = #tpu.dot_dimension_numbers<[1], [0], [0], [1], [0, 0, 1, 1], [], []>} : vector<8x32xf32>, vector<32x32xf32>, vector<8x32xf32> -> vector<8x32xf32>
    %74 = vector.extract_strided_slice %18 {offsets = [40, 0], sizes = [8, 32], strides = [1, 1]} : vector<56x32xf32> to vector<8x32xf32>
    %75 = arith.addf %73, %74 : vector<8x32xf32>
    %cst_42 = arith.constant 0.000000e+00 : f32
    %76 = vector.broadcast %cst_42 : f32 to vector<8x32xf32>
    %77 = arith.maximumf %75, %76 : vector<8x32xf32>
    %cst_43 = arith.constant dense<0.000000e+00> : vector<8x32xf32>
    %78 = tpu.matmul %77, %2, %cst_43 {dimension_numbers = #tpu.dot_dimension_numbers<[1], [0], [0], [1], [0, 0, 1, 1], [], []>} : vector<8x32xf32>, vector<32x32xf32>, vector<8x32xf32> -> vector<8x32xf32>
    %79 = arith.addf %78, %21 : vector<8x32xf32>
    %cst_44 = arith.constant 0.000000e+00 : f32
    %80 = vector.broadcast %cst_44 : f32 to vector<8x32xf32>
    %81 = arith.maximumf %79, %80 : vector<8x32xf32>
    %cst_45 = arith.constant dense<0.000000e+00> : vector<8x32xf32>
    %82 = tpu.matmul %81, %5, %cst_45 {dimension_numbers = #tpu.dot_dimension_numbers<[1], [0], [0], [1], [0, 0, 1, 1], [], []>} : vector<8x32xf32>, vector<32x32xf32>, vector<8x32xf32> -> vector<8x32xf32>
    %83 = vector.extract_strided_slice %18 {offsets = [48, 0], sizes = [8, 32], strides = [1, 1]} : vector<56x32xf32> to vector<8x32xf32>
    %84 = arith.addf %82, %83 : vector<8x32xf32>
    %cst_46 = arith.constant 0.000000e+00 : f32
    %85 = vector.broadcast %cst_46 : f32 to vector<8x32xf32>
    %86 = arith.maximumf %84, %85 : vector<8x32xf32>
    %cst_47 = arith.constant dense<0.000000e+00> : vector<8x32xf32>
    %87 = tpu.matmul %86, %2, %cst_47 {dimension_numbers = #tpu.dot_dimension_numbers<[1], [0], [0], [1], [0, 0, 1, 1], [], []>} : vector<8x32xf32>, vector<32x32xf32>, vector<8x32xf32> -> vector<8x32xf32>
    %88 = arith.addf %87, %21 : vector<8x32xf32>
    %cst_48 = arith.constant 0.000000e+00 : f32
    %89 = vector.broadcast %cst_48 : f32 to vector<8x32xf32>
    %90 = arith.maximumf %88, %89 : vector<8x32xf32>
    %91 = tpu.concatenate %27, %36, %45, %54, %63, %72, %81, %90 in 0 : vector<8x32xf32>, vector<8x32xf32>, vector<8x32xf32>, vector<8x32xf32>, vector<8x32xf32>, vector<8x32xf32>, vector<8x32xf32>, vector<8x32xf32> -> vector<64x32xf32>
    %cst_49 = arith.constant dense<0.000000e+00> : vector<64x8xf32>
    %92 = tpu.matmul %91, %3, %cst_49 {dimension_numbers = #tpu.dot_dimension_numbers<[1], [0], [0], [1], [0, 0, 1, 1], [], []>} : vector<64x32xf32>, vector<32x8xf32>, vector<64x8xf32> -> vector<64x8xf32>
    %93 = vector.broadcast %4 : vector<1x8xf32> to vector<64x8xf32>
    %94 = arith.addf %92, %93 : vector<64x8xf32>
    %c0_50 = arith.constant 0 : index
    %c0_51 = arith.constant 0 : index
    %95 = vector.load %arg8[%c0_50, %c0_51] : memref<72x8xf32, #tpu.memory_space<vmem>>, vector<8x8xf32>
    tpu.vector_store %arg8[%c0_50, %c0_51], %12 {strides = array<i32>} : memref<72x8xf32, #tpu.memory_space<vmem>>, vector<8x8xf32>,
    %c8 = arith.constant 8 : index
    %c0_52 = arith.constant 0 : index
    %96 = vector.load %arg8[%c8, %c0_52] : memref<72x8xf32, #tpu.memory_space<vmem>>, vector<64x8xf32>
    tpu.vector_store %arg8[%c8, %c0_52], %94 {strides = array<i32>} : memref<72x8xf32, #tpu.memory_space<vmem>>, vector<64x8xf32>,
    return
  }
}

</mosaic_0001>

<llo_original>
// kernel: model_fnn_forward.1
$region0: #{model_fnn_forward.1}
  #allocation0 [shape = 'u32[]', space=smem, size = 0x4, offset = 0x4, fixed_abs, tag = 'smem constant byte address 0x4 - core index']
  #allocation1 [shape = 'u32[144,128]{1,0:T(1,128)}', space=vmem, size = 0x12000, scoped, tag = 'internal scratch']
  %s0 = inlined_call_operand.vmem [shape: f32[64,16], index: 0, kind: input, shape index: {}]
  %s1 = inlined_call_operand.vmem [shape: f32[8,32], index: 1, kind: input, shape index: {}]
  %s2 = inlined_call_operand.vmem [shape: f32[16,32], index: 2, kind: input, shape index: {}]
  %s3 = inlined_call_operand.vmem [shape: f32[1,32], index: 3, kind: input, shape index: {}]
  %s4 = inlined_call_operand.hbm [shape: f32[32,32], index: 4, kind: input, shape index: {}]
  %s5 = inlined_call_operand.vmem [shape: f32[1,32], index: 5, kind: input, shape index: {}]
  %s6 = inlined_call_operand.vmem [shape: f32[32,8], index: 6, kind: input, shape index: {}]
  %s7 = inlined_call_operand.vmem [shape: f32[1,8], index: 7, kind: input, shape index: {}]
  %s8 = inlined_call_operand.vmem [shape: f32[72,8], index: 8, kind: output, shape index: {}]
  %s9 = sld [smem:[#allocation0]]
  $region46: #{model_fnn_forward.1} parent=0
    _
  %s11 = ssub.s32 1, %s9
  %s12 = scalar_select 0, %s11, %s9
  $region1: #{model_fnn_forward.1} parent=0
    #allocation2 [shape = 'u8[16384]{0}', space=vmem, size = 0x4000, scoped, tag = 'input window, operand 4, single buffered']
    #allocation3 [shape = 's32[1]{0}', space=sflag, size = 0x4, scoped, tag = 'scoped memory for model_fnn_forward.1']
    %13 = vsyncpa [#allocation3], 0
    // Predicated region
    $region2: #{model_fnn_forward.1} parent=1 // pred_check
      _
    $region3: #{model_fnn_forward.1} parent=1 // pred_check_branch
      %15 = sbr.rel (0) target = $region5
    $region4: #{model_fnn_forward.1} parent=1 // pred_region
      _
    $region5: #{model_fnn_forward.1} parent=1 // pred_fallthru
      _
    // Predicated region
    $region6: #{model_fnn_forward.1} parent=1 // pred_check
      _
    $region7: #{model_fnn_forward.1} parent=1 // pred_check_branch
      %17 = sbr.rel (0) target = $region9
    $region8: #{model_fnn_forward.1} parent=1 // pred_region
      _
    $region9: #{model_fnn_forward.1} parent=1 // pred_fallthru
      _
    // Predicated region
    $region10: #{model_fnn_forward.1} parent=1 // pred_check
      _
    $region11: #{model_fnn_forward.1} parent=1 // pred_check_branch
      %19 = sbr.rel (0) target = $region13
    $region12: #{model_fnn_forward.1} parent=1 // pred_region
      _
    $region13: #{model_fnn_forward.1} parent=1 // pred_fallthru
      _
    // Predicated region
    $region14: #{model_fnn_forward.1} parent=1 // pred_check
      _
    $region15: #{model_fnn_forward.1} parent=1 // pred_check_branch
      %21 = sbr.rel (0) target = $region17
    $region16: #{model_fnn_forward.1} parent=1 // pred_region
      _
    $region17: #{model_fnn_forward.1} parent=1 // pred_fallthru
      _
    // Predicated region
    $region18: #{model_fnn_forward.1} parent=1 // pred_check
      _
    $region19: #{model_fnn_forward.1} parent=1 // pred_check_branch
      %23 = sbr.rel (0) target = $region21
    $region20: #{model_fnn_forward.1} parent=1 // pred_region
      %s25 = ssub.s32 512, 512
      %26 = vsyncadd [#allocation3], %s25
      %s27 = sshll.u32 [#allocation2], 4
      %s28 = int_to_ptr.vmem [resolvable:$true] %s27
      %33 = dma.hbm_to_vmem [thread:$0]  %s4, 512, %s28, [#allocation3], 128, 128, 8
    $region21: #{model_fnn_forward.1} parent=1 // pred_fallthru
      _
    // Predicated region
    $region22: #{model_fnn_forward.1} parent=1 // pred_check
      _
    $region23: #{model_fnn_forward.1} parent=1 // pred_check_branch
      %35 = sbr.rel (0) target = $region25
    $region24: #{model_fnn_forward.1} parent=1 // pred_region
      _
    $region25: #{model_fnn_forward.1} parent=1 // pred_fallthru
      _
    // Predicated region
    $region26: #{model_fnn_forward.1} parent=1 // pred_check
      _
    $region27: #{model_fnn_forward.1} parent=1 // pred_check_branch
      %37 = sbr.rel (0) target = $region29
    $region28: #{model_fnn_forward.1} parent=1 // pred_region
      _
    $region29: #{model_fnn_forward.1} parent=1 // pred_fallthru
      _
    // Predicated region
    $region30: #{model_fnn_forward.1} parent=1 // pred_check
      _
    $region31: #{model_fnn_forward.1} parent=1 // pred_check_branch
      %39 = sbr.rel (0) target = $region33
    $region32: #{model_fnn_forward.1} parent=1 // pred_region
      _
    $region33: #{model_fnn_forward.1} parent=1 // pred_fallthru
      _
    // Predicated region
    $region34: #{model_fnn_forward.1} parent=1 // pred_check
      _
    $region35: #{model_fnn_forward.1} parent=1 // pred_check_branch
      %41 = sbr.rel (0) target = $region37
    $region36: #{model_fnn_forward.1} parent=1 // pred_region
      %42 = dma.done [#allocation3], 512
    $region37: #{model_fnn_forward.1} parent=1 // pred_fallthru
      _
    %v43 = vld [vmem:[%s0] sm:$0xff]
    %v44 = vld [vmem:[%s0 + $0x8] sm:$0xff]
    %v45 = vld [vmem:[%s0 + $0x10] sm:$0xff]
    %v46 = vld [vmem:[%s0 + $0x18] sm:$0xff]
    %v47 = vld [vmem:[%s0 + $0x20] sm:$0xff]
    %v48 = vld [vmem:[%s0 + $0x28] sm:$0xff]
    %v49 = vld [vmem:[%s0 + $0x30] sm:$0xff]
    %v50 = vld [vmem:[%s0 + $0x38] sm:$0xff]
    %v51 = vld [vmem:[%s1] sm:$0xff]
    %v52 = vld [vmem:[#allocation2] sm:$0xff]
    %v53 = vld [vmem:[#allocation2 + $0x8] sm:$0xff]
    %v54 = vld [vmem:[#allocation2 + $0x10] sm:$0xff]
    %v55 = vld [vmem:[#allocation2 + $0x18] sm:$0xff]
    %v56 = vld [vmem:[%s6] sm:$0xff]
    %v57 = vld [vmem:[%s6 + $0x8] sm:$0xff]
    %v58 = vld [vmem:[%s6 + $0x10] sm:$0xff]
    %v59 = vld [vmem:[%s6 + $0x18] sm:$0xff]
    %v60 = vld [vmem:[%s7] sm:$0x1]
    %vm61 = vcmask 64512
    %v63 = vsel %vm61, %v56, 0
    %v66 = vsel %vm61, %v57, 0
    %v69 = vsel %vm61, %v58, 0
    %v72 = vsel %vm61, %v59, 0
    %74 = vmatprep.subr.mxu0 0.0
    %75 = vmatpush1.msra.mxu0 %v51
    %76 = vmatprep.subr.mxu0 0.0
    %77 = vmatpush1.msra.mxu0 0.0
    %78 = vmatprep.subr.mxu0 0.0
    %79 = vmatpush1.msra.mxu0 0.0
    %80 = vmatprep.subr.mxu0 0.0
    %81 = vmatpush1.msra.mxu0 0.0
    %82 = vmatprep.subr.mxu0 0.0
    %83 = vmatpush1.msra.mxu0 0.0
    %84 = vmatprep.subr.mxu0 0.0
    %85 = vmatpush1.msra.mxu0 0.0
    %86 = vmatprep.subr.mxu0 0.0
    %87 = vmatpush1.msra.mxu0 0.0
    %88 = vmatprep.subr.mxu0 0.0
    %89 = vmatpush1.msra.mxu0 0.0
    %90 = vmatprep.subr.mxu0 0.0
    %91 = vmatpush1.msra.mxu0 0.0
    %92 = vmatprep.subr.mxu0 0.0
    %93 = vmatpush1.msra.mxu0 0.0
    %94 = vmatprep.subr.mxu0 0.0
    %95 = vmatpush1.msra.mxu0 0.0
    %96 = vmatprep.subr.mxu0 0.0
    %97 = vmatpush1.msra.mxu0 0.0
    %98 = vmatprep.subr.mxu0 0.0
    %99 = vmatpush1.msra.mxu0 0.0
    %100 = vmatprep.subr.mxu0 0.0
    %101 = vmatpush1.msra.mxu0 0.0
    %102 = vmatprep.subr.mxu0 0.0
    %103 = vmatpush1.msra.mxu0 0.0
    %104 = vmatprep.subr.mxu0 0.0
    %105 = vmatpush1.msra.mxu0 0.0
    %106 = vmatprep.subr.mxu0 0.0
    %107 = vmatpush1.msra.mxu0 0.0
    %108 = vmatprep.subr.mxu0 0.0
    %109 = vmatpush1.msra.mxu0 0.0
    %110 = vmatprep.subr.mxu0 0.0
    %111 = vmatpush1.msra.mxu0 0.0
    %112 = vmatprep.subr.mxu0 0.0
    %113 = vmatpush1.msra.mxu0 0.0
    %114 = vmatprep.subr.mxu0 0.0
    %115 = vmatpush1.msra.mxu0 0.0
    %116 = vmatprep.subr.mxu0 0.0
    %117 = vmatpush1.msra.mxu0 0.0
    %118 = vmatprep.subr.mxu0 0.0
    %119 = vmatpush1.msra.mxu0 0.0
    %120 = vmatprep.subr.mxu0 0.0
    %121 = vmatpush1.msra.mxu0 0.0
    %122 = vmatprep.subr.mxu0 0.0
    %123 = vmatpush1.msra.mxu0 0.0
    %124 = vmatprep.subr.mxu0 0.0
    %125 = vmatpush1.msra.mxu0 0.0
    %126 = vmatprep.subr.mxu0 0.0
    %127 = vmatpush1.msra.mxu0 0.0
    %128 = vmatprep.subr.mxu0 0.0
    %129 = vmatpush1.msra.mxu0 0.0
    %130 = vmatprep.subr.mxu0 0.0
    %131 = vmatpush1.msra.mxu0 0.0
    %132 = vmatprep.subr.mxu0 0.0
    %133 = vmatpush1.msra.mxu0 0.0
    %134 = vmatprep.subr.mxu0 0.0
    %135 = vmatpush1.msra.mxu0 0.0
    %136 = vmatprep.subr.mxu0 0.0
    %137 = vmatpush1.msra.mxu0 0.0
    %138 = vmatprep.mubr.f32.mxu0 0.0
    %139 = vmatmul.mubr.f32.gmra.mrb[0].mxu0 %v63
    %v140 = vpop.f32.mrb[0].mxu0
    %v141 = vadd.f32 0.0, %v140
    %v142 = vpop.f32.mrb[0].mxu0
    %143 = vmatprep.mubr.f32.mxu0 0.0
    %144 = vmatmul.mubr.f32.gmra.mrb[0].mxu0 %v66
    %v145 = vpop.f32.mrb[0].mxu0
    %v146 = vadd.f32 0.0, %v145
    %v147 = vpop.f32.mrb[0].mxu0
    %148 = vmatprep.mubr.f32.mxu0 0.0
    %149 = vmatmul.mubr.f32.gmra.mrb[0].mxu0 %v69
    %v150 = vpop.f32.mrb[0].mxu0
    %v151 = vadd.f32 0.0, %v150
    %v152 = vpop.f32.mrb[0].mxu0
    %153 = vmatprep.mubr.f32.mxu0 0.0
    %154 = vmatmul.mubr.f32.gmra.mrb[0].mxu0 %v72
    %v155 = vpop.f32.mrb[0].mxu0
    %v156 = vadd.f32 0.0, %v155
    %v157 = vpop.f32.mrb[0].mxu0
    %158 = vdwg.mxu0
    %v160 = vsel %vm61, %v60, 0
    %162 = vmatprep.subr.mxu0 0.0
    %163 = vmatpush1.msra.mxu0 %v51
    %164 = vmatprep.subr.mxu0 0.0
    %165 = vmatpush1.msra.mxu0 0.0
    %166 = vmatprep.subr.mxu0 0.0
    %167 = vmatpush1.msra.mxu0 0.0
    %168 = vmatprep.subr.mxu0 0.0
    %169 = vmatpush1.msra.mxu0 0.0
    %170 = vmatprep.subr.mxu0 0.0
    %171 = vmatpush1.msra.mxu0 0.0
    %172 = vmatprep.subr.mxu0 0.0
    %173 = vmatpush1.msra.mxu0 0.0
    %174 = vmatprep.subr.mxu0 0.0
    %175 = vmatpush1.msra.mxu0 0.0
    %176 = vmatprep.subr.mxu0 0.0
    %177 = vmatpush1.msra.mxu0 0.0
    %178 = vmatprep.subr.mxu0 0.0
    %179 = vmatpush1.msra.mxu0 0.0
    %180 = vmatprep.subr.mxu0 0.0
    %181 = vmatpush1.msra.mxu0 0.0
    %182 = vmatprep.subr.mxu0 0.0
    %183 = vmatpush1.msra.mxu0 0.0
    %184 = vmatprep.subr.mxu0 0.0
    %185 = vmatpush1.msra.mxu0 0.0
    %186 = vmatprep.subr.mxu0 0.0
    %187 = vmatpush1.msra.mxu0 0.0
    %188 = vmatprep.subr.mxu0 0.0
    %189 = vmatpush1.msra.mxu0 0.0
    %190 = vmatprep.subr.mxu0 0.0
    %191 = vmatpush1.msra.mxu0 0.0
    %192 = vmatprep.subr.mxu0 0.0
    %193 = vmatpush1.msra.mxu0 0.0
    %194 = vmatprep.subr.mxu0 0.0
    %195 = vmatpush1.msra.mxu0 0.0
    %196 = vmatprep.subr.mxu0 0.0
    %197 = vmatpush1.msra.mxu0 0.0
    %198 = vmatprep.subr.mxu0 0.0
    %199 = vmatpush1.msra.mxu0 0.0
    %200 = vmatprep.subr.mxu0 0.0
    %201 = vmatpush1.msra.mxu0 0.0
    %202 = vmatprep.subr.mxu0 0.0
    %203 = vmatpush1.msra.mxu0 0.0
    %204 = vmatprep.subr.mxu0 0.0
    %205 = vmatpush1.msra.mxu0 0.0
    %206 = vmatprep.subr.mxu0 0.0
    %207 = vmatpush1.msra.mxu0 0.0
    %208 = vmatprep.subr.mxu0 0.0
    %209 = vmatpush1.msra.mxu0 0.0
    %210 = vmatprep.subr.mxu0 0.0
    %211 = vmatpush1.msra.mxu0 0.0
    %212 = vmatprep.subr.mxu0 0.0
    %213 = vmatpush1.msra.mxu0 0.0
    %214 = vmatprep.subr.mxu0 0.0
    %215 = vmatpush1.msra.mxu0 0.0
    %216 = vmatprep.subr.mxu0 0.0
    %217 = vmatpush1.msra.mxu0 0.0
    %218 = vmatprep.subr.mxu0 0.0
    %219 = vmatpush1.msra.mxu0 0.0
    %220 = vmatprep.subr.mxu0 0.0
    %221 = vmatpush1.msra.mxu0 0.0
    %222 = vmatprep.subr.mxu0 0.0
    %223 = vmatpush1.msra.mxu0 0.0
    %224 = vmatprep.subr.mxu0 0.0
    %225 = vmatpush1.msra.mxu0 0.0
    %226 = vmatprep.mubr.f32.mxu0 0.0
    %227 = vmatmul.mubr.f32.gmra.mrb[0].mxu0 %v160
    %v228 = vpop.f32.mrb[0].mxu0
    %v229 = vadd.f32 0.0, %v228
    %v230 = vpop.f32.mrb[0].mxu0
    %231 = vdwg.mxu0
    %v232 = vld [vmem:[%s2] sm:$0xff]
    %v233 = vld [vmem:[%s2 + $0x8] sm:$0xff]
    %v234 = vld [vmem:[%s3] sm:$0x1]
    %v236 = vlaneseq
    %v237 = vshrl.u32 %v236, 7
    %v238 = vsub.s32 0, %v237
    %v239 = vrot.slane %v234, %v238
    %vm241 = vcmask 130048
    %v243 = vsel %vm241, %v43, 0
    %v246 = vsel %vm241, %v44, 0
    %v249 = vsel %vm241, %v45, 0
    %v252 = vsel %vm241, %v46, 0
    %v255 = vsel %vm241, %v47, 0
    %v258 = vsel %vm241, %v48, 0
    %v261 = vsel %vm241, %v49, 0
    %v264 = vsel %vm241, %v50, 0
    %266 = vmatprep.subr.mxu0 0.0
    %267 = vmatpush1.msra.mxu0 %v232
    %268 = vmatprep.subr.mxu0 0.0
    %269 = vmatpush1.msra.mxu0 %v233
    %270 = vmatprep.subr.mxu0 0.0
    %271 = vmatpush1.msra.mxu0 0.0
    %272 = vmatprep.subr.mxu0 0.0
    %273 = vmatpush1.msra.mxu0 0.0
    %274 = vmatprep.subr.mxu0 0.0
    %275 = vmatpush1.msra.mxu0 0.0
    %276 = vmatprep.subr.mxu0 0.0
    %277 = vmatpush1.msra.mxu0 0.0
    %278 = vmatprep.subr.mxu0 0.0
    %279 = vmatpush1.msra.mxu0 0.0
    %280 = vmatprep.subr.mxu0 0.0
    %281 = vmatpush1.msra.mxu0 0.0
    %282 = vmatprep.subr.mxu0 0.0
    %283 = vmatpush1.msra.mxu0 0.0
    %284 = vmatprep.subr.mxu0 0.0
    %285 = vmatpush1.msra.mxu0 0.0
    %286 = vmatprep.subr.mxu0 0.0
    %287 = vmatpush1.msra.mxu0 0.0
    %288 = vmatprep.subr.mxu0 0.0
    %289 = vmatpush1.msra.mxu0 0.0
    %290 = vmatprep.subr.mxu0 0.0
    %291 = vmatpush1.msra.mxu0 0.0
    %292 = vmatprep.subr.mxu0 0.0
    %293 = vmatpush1.msra.mxu0 0.0
    %294 = vmatprep.subr.mxu0 0.0
    %295 = vmatpush1.msra.mxu0 0.0
    %296 = vmatprep.subr.mxu0 0.0
    %297 = vmatpush1.msra.mxu0 0.0
    %298 = vmatprep.subr.mxu0 0.0
    %299 = vmatpush1.msra.mxu0 0.0
    %300 = vmatprep.subr.mxu0 0.0
    %301 = vmatpush1.msra.mxu0 0.0
    %302 = vmatprep.subr.mxu0 0.0
    %303 = vmatpush1.msra.mxu0 0.0
    %304 = vmatprep.subr.mxu0 0.0
    %305 = vmatpush1.msra.mxu0 0.0
    %306 = vmatprep.subr.mxu0 0.0
    %307 = vmatpush1.msra.mxu0 0.0
    %308 = vmatprep.subr.mxu0 0.0
    %309 = vmatpush1.msra.mxu0 0.0
    %310 = vmatprep.subr.mxu0 0.0
    %311 = vmatpush1.msra.mxu0 0.0
    %312 = vmatprep.subr.mxu0 0.0
    %313 = vmatpush1.msra.mxu0 0.0
    %314 = vmatprep.subr.mxu0 0.0
    %315 = vmatpush1.msra.mxu0 0.0
    %316 = vmatprep.subr.mxu0 0.0
    %317 = vmatpush1.msra.mxu0 0.0
    %318 = vmatprep.subr.mxu0 0.0
    %319 = vmatpush1.msra.mxu0 0.0
    %320 = vmatprep.subr.mxu0 0.0
    %321 = vmatpush1.msra.mxu0 0.0
    %322 = vmatprep.subr.mxu0 0.0
    %323 = vmatpush1.msra.mxu0 0.0
    %324 = vmatprep.subr.mxu0 0.0
    %325 = vmatpush1.msra.mxu0 0.0
    %326 = vmatprep.subr.mxu0 0.0
    %327 = vmatpush1.msra.mxu0 0.0
    %328 = vmatprep.subr.mxu0 0.0
    %329 = vmatpush1.msra.mxu0 0.0
    %330 = vmatprep.mubr.f32.mxu0 0.0
    %331 = vmatmul.mubr.f32.gmra.mrb[0].mxu0 %v243
    %v332 = vpop.f32.mrb[0].mxu0
    %v333 = vadd.f32 %v239, %v332
    %v334 = vpop.f32.mrb[0].mxu0
    %335 = vmatprep.mubr.f32.mxu0 0.0
    %336 = vmatmul.mubr.f32.gmra.mrb[0].mxu0 %v246
    %v337 = vpop.f32.mrb[0].mxu0
    %v338 = vadd.f32 %v239, %v337
    %v339 = vpop.f32.mrb[0].mxu0
    %340 = vmatprep.mubr.f32.mxu0 0.0
    %341 = vmatmul.mubr.f32.gmra.mrb[0].mxu0 %v249
    %v342 = vpop.f32.mrb[0].mxu0
    %v343 = vadd.f32 %v239, %v342
    %v344 = vpop.f32.mrb[0].mxu0
    %345 = vmatprep.mubr.f32.mxu0 0.0
    %346 = vmatmul.mubr.f32.gmra.mrb[0].mxu0 %v252
    %v347 = vpop.f32.mrb[0].mxu0
    %v348 = vadd.f32 %v239, %v347
    %v349 = vpop.f32.mrb[0].mxu0
    %350 = vmatprep.mubr.f32.mxu0 0.0
    %351 = vmatmul.mubr.f32.gmra.mrb[0].mxu0 %v255
    %v352 = vpop.f32.mrb[0].mxu0
    %v353 = vadd.f32 %v239, %v352
    %v354 = vpop.f32.mrb[0].mxu0
    %355 = vmatprep.mubr.f32.mxu0 0.0
    %356 = vmatmul.mubr.f32.gmra.mrb[0].mxu0 %v258
    %v357 = vpop.f32.mrb[0].mxu0
    %v358 = vadd.f32 %v239, %v357
    %v359 = vpop.f32.mrb[0].mxu0
    %360 = vmatprep.mubr.f32.mxu0 0.0
    %361 = vmatmul.mubr.f32.gmra.mrb[0].mxu0 %v261
    %v362 = vpop.f32.mrb[0].mxu0
    %v363 = vadd.f32 %v239, %v362
    %v364 = vpop.f32.mrb[0].mxu0
    %365 = vmatprep.mubr.f32.mxu0 0.0
    %366 = vmatmul.mubr.f32.gmra.mrb[0].mxu0 %v264
    %v367 = vpop.f32.mrb[0].mxu0
    %v368 = vadd.f32 %v239, %v367
    %v369 = vpop.f32.mrb[0].mxu0
    %370 = vdwg.mxu0
    %v371 = vsel %vm61, %v43, 0
    %373 = vmatprep.subr.mxu0 0.0
    %374 = vmatpush1.msra.mxu0 %v51
    %375 = vmatprep.subr.mxu0 0.0
    %376 = vmatpush1.msra.mxu0 0.0
    %377 = vmatprep.subr.mxu0 0.0
    %378 = vmatpush1.msra.mxu0 0.0
    %379 = vmatprep.subr.mxu0 0.0
    %380 = vmatpush1.msra.mxu0 0.0
    %381 = vmatprep.subr.mxu0 0.0
    %382 = vmatpush1.msra.mxu0 0.0
    %383 = vmatprep.subr.mxu0 0.0
    %384 = vmatpush1.msra.mxu0 0.0
    %385 = vmatprep.subr.mxu0 0.0
    %386 = vmatpush1.msra.mxu0 0.0
    %387 = vmatprep.subr.mxu0 0.0
    %388 = vmatpush1.msra.mxu0 0.0
    %389 = vmatprep.subr.mxu0 0.0
    %390 = vmatpush1.msra.mxu0 0.0
    %391 = vmatprep.subr.mxu0 0.0
    %392 = vmatpush1.msra.mxu0 0.0
    %393 = vmatprep.subr.mxu0 0.0
    %394 = vmatpush1.msra.mxu0 0.0
    %395 = vmatprep.subr.mxu0 0.0
    %396 = vmatpush1.msra.mxu0 0.0
    %397 = vmatprep.subr.mxu0 0.0
    %398 = vmatpush1.msra.mxu0 0.0
    %399 = vmatprep.subr.mxu0 0.0
    %400 = vmatpush1.msra.mxu0 0.0
    %401 = vmatprep.subr.mxu0 0.0
    %402 = vmatpush1.msra.mxu0 0.0
    %403 = vmatprep.subr.mxu0 0.0
    %404 = vmatpush1.msra.mxu0 0.0
    %405 = vmatprep.subr.mxu0 0.0
    %406 = vmatpush1.msra.mxu0 0.0
    %407 = vmatprep.subr.mxu0 0.0
    %408 = vmatpush1.msra.mxu0 0.0
    %409 = vmatprep.subr.mxu0 0.0
    %410 = vmatpush1.msra.mxu0 0.0
    %411 = vmatprep.subr.mxu0 0.0
    %412 = vmatpush1.msra.mxu0 0.0
    %413 = vmatprep.subr.mxu0 0.0
    %414 = vmatpush1.msra.mxu0 0.0
    %415 = vmatprep.subr.mxu0 0.0
    %416 = vmatpush1.msra.mxu0 0.0
    %417 = vmatprep.subr.mxu0 0.0
    %418 = vmatpush1.msra.mxu0 0.0
    %419 = vmatprep.subr.mxu0 0.0
    %420 = vmatpush1.msra.mxu0 0.0
    %421 = vmatprep.subr.mxu0 0.0
    %422 = vmatpush1.msra.mxu0 0.0
    %423 = vmatprep.subr.mxu0 0.0
    %424 = vmatpush1.msra.mxu0 0.0
    %425 = vmatprep.subr.mxu0 0.0
    %426 = vmatpush1.msra.mxu0 0.0
    %427 = vmatprep.subr.mxu0 0.0
    %428 = vmatpush1.msra.mxu0 0.0
    %429 = vmatprep.subr.mxu0 0.0
    %430 = vmatpush1.msra.mxu0 0.0
    %431 = vmatprep.subr.mxu0 0.0
    %432 = vmatpush1.msra.mxu0 0.0
    %433 = vmatprep.subr.mxu0 0.0
    %434 = vmatpush1.msra.mxu0 0.0
    %435 = vmatprep.subr.mxu0 0.0
    %436 = vmatpush1.msra.mxu0 0.0
    %437 = vmatprep.mubr.f32.mxu0 0.0
    %438 = vmatmul.mubr.f32.gmra.mrb[0].mxu0 %v371
    %v439 = vpop.f32.mrb[0].mxu0
    %v440 = vadd.f32 %v333, %v439
    %v441 = vpop.f32.mrb[0].mxu0
    %442 = vdwg.mxu0
    %v443 = vlaneseq
    %v444 = vshrl.u32 %v443, 7
    %v445 = vsub.s32 0, %v444
    %v446 = vrot.slane %v229, %v445
    %v447 = vadd.f32 %v338, %v446
    %v448 = vadd.f32 %v343, %v446
    %v449 = vadd.f32 %v348, %v446
    %v450 = vadd.f32 %v353, %v446
    %v451 = vadd.f32 %v358, %v446
    %v452 = vadd.f32 %v363, %v446
    %v453 = vadd.f32 %v368, %v446
    %v454 = vld [vmem:[%s5] sm:$0x1]
    %v456 = vlaneseq
    %v457 = vshrl.u32 %v456, 7
    %v458 = vsub.s32 0, %v457
    %v459 = vrot.slane %v454, %v458
    %v461 = vmax.f32 %v440, 0.0
    %vm462 = vcmask 261120
    %v464 = vsel %vm462, %v461, 0
    %466 = vmatprep.subr.mxu0 0.0
    %467 = vmatpush1.msra.mxu0 %v52
    %468 = vmatprep.subr.mxu0 0.0
    %469 = vmatpush1.msra.mxu0 %v53
    %470 = vmatprep.subr.mxu0 0.0
    %471 = vmatpush1.msra.mxu0 %v54
    %472 = vmatprep.subr.mxu0 0.0
    %473 = vmatpush1.msra.mxu0 %v55
    %474 = vmatprep.subr.mxu0 0.0
    %475 = vmatpush1.msra.mxu0 0.0
    %476 = vmatprep.subr.mxu0 0.0
    %477 = vmatpush1.msra.mxu0 0.0
    %478 = vmatprep.subr.mxu0 0.0
    %479 = vmatpush1.msra.mxu0 0.0
    %480 = vmatprep.subr.mxu0 0.0
    %481 = vmatpush1.msra.mxu0 0.0
    %482 = vmatprep.subr.mxu0 0.0
    %483 = vmatpush1.msra.mxu0 0.0
    %484 = vmatprep.subr.mxu0 0.0
    %485 = vmatpush1.msra.mxu0 0.0
    %486 = vmatprep.subr.mxu0 0.0
    %487 = vmatpush1.msra.mxu0 0.0
    %488 = vmatprep.subr.mxu0 0.0
    %489 = vmatpush1.msra.mxu0 0.0
    %490 = vmatprep.subr.mxu0 0.0
    %491 = vmatpush1.msra.mxu0 0.0
    %492 = vmatprep.subr.mxu0 0.0
    %493 = vmatpush1.msra.mxu0 0.0
    %494 = vmatprep.subr.mxu0 0.0
    %495 = vmatpush1.msra.mxu0 0.0
    %496 = vmatprep.subr.mxu0 0.0
    %497 = vmatpush1.msra.mxu0 0.0
    %498 = vmatprep.subr.mxu0 0.0
    %499 = vmatpush1.msra.mxu0 0.0
    %500 = vmatprep.subr.mxu0 0.0
    %501 = vmatpush1.msra.mxu0 0.0
    %502 = vmatprep.subr.mxu0 0.0
    %503 = vmatpush1.msra.mxu0 0.0
    %504 = vmatprep.subr.mxu0 0.0
    %505 = vmatpush1.msra.mxu0 0.0
    %506 = vmatprep.subr.mxu0 0.0
    %507 = vmatpush1.msra.mxu0 0.0
    %508 = vmatprep.subr.mxu0 0.0
    %509 = vmatpush1.msra.mxu0 0.0
    %510 = vmatprep.subr.mxu0 0.0
    %511 = vmatpush1.msra.mxu0 0.0
    %512 = vmatprep.subr.mxu0 0.0
    %513 = vmatpush1.msra.mxu0 0.0
    %514 = vmatprep.subr.mxu0 0.0
    %515 = vmatpush1.msra.mxu0 0.0
    %516 = vmatprep.subr.mxu0 0.0
    %517 = vmatpush1.msra.mxu0 0.0
    %518 = vmatprep.subr.mxu0 0.0
    %519 = vmatpush1.msra.mxu0 0.0
    %520 = vmatprep.subr.mxu0 0.0
    %521 = vmatpush1.msra.mxu0 0.0
    %522 = vmatprep.subr.mxu0 0.0
    %523 = vmatpush1.msra.mxu0 0.0
    %524 = vmatprep.subr.mxu0 0.0
    %525 = vmatpush1.msra.mxu0 0.0
    %526 = vmatprep.subr.mxu0 0.0
    %527 = vmatpush1.msra.mxu0 0.0
    %528 = vmatprep.subr.mxu0 0.0
    %529 = vmatpush1.msra.mxu0 0.0
    %530 = vmatprep.mubr.f32.mxu0 0.0
    %531 = vmatmul.mubr.f32.gmra.mrb[0].mxu0 %v464
    %v532 = vpop.f32.mrb[0].mxu0
    %v533 = vadd.f32 %v459, %v532
    %v534 = vpop.f32.mrb[0].mxu0
    %535 = vdwg.mxu0
    %v536 = vmax.f32 %v533, 0.0
    %v538 = vsel %vm462, %v536, 0
    %540 = vmatprep.subr.mxu0 0.0
    %541 = vmatpush1.msra.mxu0 %v141
    %542 = vmatprep.subr.mxu0 0.0
    %543 = vmatpush1.msra.mxu0 %v146
    %544 = vmatprep.subr.mxu0 0.0
    %545 = vmatpush1.msra.mxu0 %v151
    %546 = vmatprep.subr.mxu0 0.0
    %547 = vmatpush1.msra.mxu0 %v156
    %548 = vmatprep.subr.mxu0 0.0
    %549 = vmatpush1.msra.mxu0 0.0
    %550 = vmatprep.subr.mxu0 0.0
    %551 = vmatpush1.msra.mxu0 0.0
    %552 = vmatprep.subr.mxu0 0.0
    %553 = vmatpush1.msra.mxu0 0.0
    %554 = vmatprep.subr.mxu0 0.0
    %555 = vmatpush1.msra.mxu0 0.0
    %556 = vmatprep.subr.mxu0 0.0
    %557 = vmatpush1.msra.mxu0 0.0
    %558 = vmatprep.subr.mxu0 0.0
    %559 = vmatpush1.msra.mxu0 0.0
    %560 = vmatprep.subr.mxu0 0.0
    %561 = vmatpush1.msra.mxu0 0.0
    %562 = vmatprep.subr.mxu0 0.0
    %563 = vmatpush1.msra.mxu0 0.0
    %564 = vmatprep.subr.mxu0 0.0
    %565 = vmatpush1.msra.mxu0 0.0
    %566 = vmatprep.subr.mxu0 0.0
    %567 = vmatpush1.msra.mxu0 0.0
    %568 = vmatprep.subr.mxu0 0.0
    %569 = vmatpush1.msra.mxu0 0.0
    %570 = vmatprep.subr.mxu0 0.0
    %571 = vmatpush1.msra.mxu0 0.0
    %572 = vmatprep.subr.mxu0 0.0
    %573 = vmatpush1.msra.mxu0 0.0
    %574 = vmatprep.subr.mxu0 0.0
    %575 = vmatpush1.msra.mxu0 0.0
    %576 = vmatprep.subr.mxu0 0.0
    %577 = vmatpush1.msra.mxu0 0.0
    %578 = vmatprep.subr.mxu0 0.0
    %579 = vmatpush1.msra.mxu0 0.0
    %580 = vmatprep.subr.mxu0 0.0
    %581 = vmatpush1.msra.mxu0 0.0
    %582 = vmatprep.subr.mxu0 0.0
    %583 = vmatpush1.msra.mxu0 0.0
    %584 = vmatprep.subr.mxu0 0.0
    %585 = vmatpush1.msra.mxu0 0.0
    %586 = vmatprep.subr.mxu0 0.0
    %587 = vmatpush1.msra.mxu0 0.0
    %588 = vmatprep.subr.mxu0 0.0
    %589 = vmatpush1.msra.mxu0 0.0
    %590 = vmatprep.subr.mxu0 0.0
    %591 = vmatpush1.msra.mxu0 0.0
    %592 = vmatprep.subr.mxu0 0.0
    %593 = vmatpush1.msra.mxu0 0.0
    %594 = vmatprep.subr.mxu0 0.0
    %595 = vmatpush1.msra.mxu0 0.0
    %596 = vmatprep.subr.mxu0 0.0
    %597 = vmatpush1.msra.mxu0 0.0
    %598 = vmatprep.subr.mxu0 0.0
    %599 = vmatpush1.msra.mxu0 0.0
    %600 = vmatprep.subr.mxu0 0.0
    %601 = vmatpush1.msra.mxu0 0.0
    %602 = vmatprep.subr.mxu0 0.0
    %603 = vmatpush1.msra.mxu0 0.0
    %604 = vmatprep.mubr.f32.mxu0 0.0
    %605 = vmatmul.mubr.f32.gmra.mrb[0].mxu0 %v538
    %v606 = vpop.f32.mrb[0].mxu0
    %v607 = vadd.f32 %v447, %v606
    %v608 = vpop.f32.mrb[0].mxu0
    %609 = vdwg.mxu0
    %v610 = vmax.f32 %v607, 0.0
    %v612 = vsel %vm462, %v610, 0
    %614 = vmatprep.subr.mxu0 0.0
    %615 = vmatpush1.msra.mxu0 %v52
    %616 = vmatprep.subr.mxu0 0.0
    %617 = vmatpush1.msra.mxu0 %v53
    %618 = vmatprep.subr.mxu0 0.0
    %619 = vmatpush1.msra.mxu0 %v54
    %620 = vmatprep.subr.mxu0 0.0
    %621 = vmatpush1.msra.mxu0 %v55
    %622 = vmatprep.subr.mxu0 0.0
    %623 = vmatpush1.msra.mxu0 0.0
    %624 = vmatprep.subr.mxu0 0.0
    %625 = vmatpush1.msra.mxu0 0.0
    %626 = vmatprep.subr.mxu0 0.0
    %627 = vmatpush1.msra.mxu0 0.0
    %628 = vmatprep.subr.mxu0 0.0
    %629 = vmatpush1.msra.mxu0 0.0
    %630 = vmatprep.subr.mxu0 0.0
    %631 = vmatpush1.msra.mxu0 0.0
    %632 = vmatprep.subr.mxu0 0.0
    %633 = vmatpush1.msra.mxu0 0.0
    %634 = vmatprep.subr.mxu0 0.0
    %635 = vmatpush1.msra.mxu0 0.0
    %636 = vmatprep.subr.mxu0 0.0
    %637 = vmatpush1.msra.mxu0 0.0
    %638 = vmatprep.subr.mxu0 0.0
    %639 = vmatpush1.msra.mxu0 0.0
    %640 = vmatprep.subr.mxu0 0.0
    %641 = vmatpush1.msra.mxu0 0.0
    %642 = vmatprep.subr.mxu0 0.0
    %643 = vmatpush1.msra.mxu0 0.0
    %644 = vmatprep.subr.mxu0 0.0
    %645 = vmatpush1.msra.mxu0 0.0
    %646 = vmatprep.subr.mxu0 0.0
    %647 = vmatpush1.msra.mxu0 0.0
    %648 = vmatprep.subr.mxu0 0.0
    %649 = vmatpush1.msra.mxu0 0.0
    %650 = vmatprep.subr.mxu0 0.0
    %651 = vmatpush1.msra.mxu0 0.0
    %652 = vmatprep.subr.mxu0 0.0
    %653 = vmatpush1.msra.mxu0 0.0
    %654 = vmatprep.subr.mxu0 0.0
    %655 = vmatpush1.msra.mxu0 0.0
    %656 = vmatprep.subr.mxu0 0.0
    %657 = vmatpush1.msra.mxu0 0.0
    %658 = vmatprep.subr.mxu0 0.0
    %659 = vmatpush1.msra.mxu0 0.0
    %660 = vmatprep.subr.mxu0 0.0
    %661 = vmatpush1.msra.mxu0 0.0
    %662 = vmatprep.subr.mxu0 0.0
    %663 = vmatpush1.msra.mxu0 0.0
    %664 = vmatprep.subr.mxu0 0.0
    %665 = vmatpush1.msra.mxu0 0.0
    %666 = vmatprep.subr.mxu0 0.0
    %667 = vmatpush1.msra.mxu0 0.0
    %668 = vmatprep.subr.mxu0 0.0
    %669 = vmatpush1.msra.mxu0 0.0
    %670 = vmatprep.subr.mxu0 0.0
    %671 = vmatpush1.msra.mxu0 0.0
    %672 = vmatprep.subr.mxu0 0.0
    %673 = vmatpush1.msra.mxu0 0.0
    %674 = vmatprep.subr.mxu0 0.0
    %675 = vmatpush1.msra.mxu0 0.0
    %676 = vmatprep.subr.mxu0 0.0
    %677 = vmatpush1.msra.mxu0 0.0
    %678 = vmatprep.mubr.f32.mxu0 0.0
    %679 = vmatmul.mubr.f32.gmra.mrb[0].mxu0 %v612
    %v680 = vpop.f32.mrb[0].mxu0
    %v681 = vadd.f32 %v459, %v680
    %v682 = vpop.f32.mrb[0].mxu0
    %683 = vdwg.mxu0
    %v684 = vmax.f32 %v681, 0.0
    %v686 = vsel %vm462, %v684, 0
    %688 = vmatprep.subr.mxu0 0.0
    %689 = vmatpush1.msra.mxu0 %v141
    %690 = vmatprep.subr.mxu0 0.0
    %691 = vmatpush1.msra.mxu0 %v146
    %692 = vmatprep.subr.mxu0 0.0
    %693 = vmatpush1.msra.mxu0 %v151
    %694 = vmatprep.subr.mxu0 0.0
    %695 = vmatpush1.msra.mxu0 %v156
    %696 = vmatprep.subr.mxu0 0.0
    %697 = vmatpush1.msra.mxu0 0.0
    %698 = vmatprep.subr.mxu0 0.0
    %699 = vmatpush1.msra.mxu0 0.0
    %700 = vmatprep.subr.mxu0 0.0
    %701 = vmatpush1.msra.mxu0 0.0
    %702 = vmatprep.subr.mxu0 0.0
    %703 = vmatpush1.msra.mxu0 0.0
    %704 = vmatprep.subr.mxu0 0.0
    %705 = vmatpush1.msra.mxu0 0.0
    %706 = vmatprep.subr.mxu0 0.0
    %707 = vmatpush1.msra.mxu0 0.0
    %708 = vmatprep.subr.mxu0 0.0
    %709 = vmatpush1.msra.mxu0 0.0
    %710 = vmatprep.subr.mxu0 0.0
    %711 = vmatpush1.msra.mxu0 0.0
    %712 = vmatprep.subr.mxu0 0.0
    %713 = vmatpush1.msra.mxu0 0.0
    %714 = vmatprep.subr.mxu0 0.0
    %715 = vmatpush1.msra.mxu0 0.0
    %716 = vmatprep.subr.mxu0 0.0
    %717 = vmatpush1.msra.mxu0 0.0
    %718 = vmatprep.subr.mxu0 0.0
    %719 = vmatpush1.msra.mxu0 0.0
    %720 = vmatprep.subr.mxu0 0.0
    %721 = vmatpush1.msra.mxu0 0.0
    %722 = vmatprep.subr.mxu0 0.0
    %723 = vmatpush1.msra.mxu0 0.0
    %724 = vmatprep.subr.mxu0 0.0
    %725 = vmatpush1.msra.mxu0 0.0
    %726 = vmatprep.subr.mxu0 0.0
    %727 = vmatpush1.msra.mxu0 0.0
    %728 = vmatprep.subr.mxu0 0.0
    %729 = vmatpush1.msra.mxu0 0.0
    %730 = vmatprep.subr.mxu0 0.0
    %731 = vmatpush1.msra.mxu0 0.0
    %732 = vmatprep.subr.mxu0 0.0
    %733 = vmatpush1.msra.mxu0 0.0
    %734 = vmatprep.subr.mxu0 0.0
    %735 = vmatpush1.msra.mxu0 0.0
    %736 = vmatprep.subr.mxu0 0.0
    %737 = vmatpush1.msra.mxu0 0.0
    %738 = vmatprep.subr.mxu0 0.0
    %739 = vmatpush1.msra.mxu0 0.0
    %740 = vmatprep.subr.mxu0 0.0
    %741 = vmatpush1.msra.mxu0 0.0
    %742 = vmatprep.subr.mxu0 0.0
    %743 = vmatpush1.msra.mxu0 0.0
    %744 = vmatprep.subr.mxu0 0.0
    %745 = vmatpush1.msra.mxu0 0.0
    %746 = vmatprep.subr.mxu0 0.0
    %747 = vmatpush1.msra.mxu0 0.0
    %748 = vmatprep.subr.mxu0 0.0
    %749 = vmatpush1.msra.mxu0 0.0
    %750 = vmatprep.subr.mxu0 0.0
    %751 = vmatpush1.msra.mxu0 0.0
    %752 = vmatprep.mubr.f32.mxu0 0.0
    %753 = vmatmul.mubr.f32.gmra.mrb[0].mxu0 %v686
    %v754 = vpop.f32.mrb[0].mxu0
    %v755 = vadd.f32 %v448, %v754
    %v756 = vpop.f32.mrb[0].mxu0
    %757 = vdwg.mxu0
    %v758 = vmax.f32 %v755, 0.0
    %v760 = vsel %vm462, %v758, 0
    %762 = vmatprep.subr.mxu0 0.0
    %763 = vmatpush1.msra.mxu0 %v52
    %764 = vmatprep.subr.mxu0 0.0
    %765 = vmatpush1.msra.mxu0 %v53
    %766 = vmatprep.subr.mxu0 0.0
    %767 = vmatpush1.msra.mxu0 %v54
    %768 = vmatprep.subr.mxu0 0.0
    %769 = vmatpush1.msra.mxu0 %v55
    %770 = vmatprep.subr.mxu0 0.0
    %771 = vmatpush1.msra.mxu0 0.0
    %772 = vmatprep.subr.mxu0 0.0
    %773 = vmatpush1.msra.mxu0 0.0
    %774 = vmatprep.subr.mxu0 0.0
    %775 = vmatpush1.msra.mxu0 0.0
    %776 = vmatprep.subr.mxu0 0.0
    %777 = vmatpush1.msra.mxu0 0.0
    %778 = vmatprep.subr.mxu0 0.0
    %779 = vmatpush1.msra.mxu0 0.0
    %780 = vmatprep.subr.mxu0 0.0
    %781 = vmatpush1.msra.mxu0 0.0
    %782 = vmatprep.subr.mxu0 0.0
    %783 = vmatpush1.msra.mxu0 0.0
    %784 = vmatprep.subr.mxu0 0.0
    %785 = vmatpush1.msra.mxu0 0.0
    %786 = vmatprep.subr.mxu0 0.0
    %787 = vmatpush1.msra.mxu0 0.0
    %788 = vmatprep.subr.mxu0 0.0
    %789 = vmatpush1.msra.mxu0 0.0
    %790 = vmatprep.subr.mxu0 0.0
    %791 = vmatpush1.msra.mxu0 0.0
    %792 = vmatprep.subr.mxu0 0.0
    %793 = vmatpush1.msra.mxu0 0.0
    %794 = vmatprep.subr.mxu0 0.0
    %795 = vmatpush1.msra.mxu0 0.0
    %796 = vmatprep.subr.mxu0 0.0
    %797 = vmatpush1.msra.mxu0 0.0
    %798 = vmatprep.subr.mxu0 0.0
    %799 = vmatpush1.msra.mxu0 0.0
    %800 = vmatprep.subr.mxu0 0.0
    %801 = vmatpush1.msra.mxu0 0.0
    %802 = vmatprep.subr.mxu0 0.0
    %803 = vmatpush1.msra.mxu0 0.0
    %804 = vmatprep.subr.mxu0 0.0
    %805 = vmatpush1.msra.mxu0 0.0
    %806 = vmatprep.subr.mxu0 0.0
    %807 = vmatpush1.msra.mxu0 0.0
    %808 = vmatprep.subr.mxu0 0.0
    %809 = vmatpush1.msra.mxu0 0.0
    %810 = vmatprep.subr.mxu0 0.0
    %811 = vmatpush1.msra.mxu0 0.0
    %812 = vmatprep.subr.mxu0 0.0
    %813 = vmatpush1.msra.mxu0 0.0
    %814 = vmatprep.subr.mxu0 0.0
    %815 = vmatpush1.msra.mxu0 0.0
    %816 = vmatprep.subr.mxu0 0.0
    %817 = vmatpush1.msra.mxu0 0.0
    %818 = vmatprep.subr.mxu0 0.0
    %819 = vmatpush1.msra.mxu0 0.0
    %820 = vmatprep.subr.mxu0 0.0
    %821 = vmatpush1.msra.mxu0 0.0
    %822 = vmatprep.subr.mxu0 0.0
    %823 = vmatpush1.msra.mxu0 0.0
    %824 = vmatprep.subr.mxu0 0.0
    %825 = vmatpush1.msra.mxu0 0.0
    %826 = vmatprep.mubr.f32.mxu0 0.0
    %827 = vmatmul.mubr.f32.gmra.mrb[0].mxu0 %v760
    %v828 = vpop.f32.mrb[0].mxu0
    %v829 = vadd.f32 %v459, %v828
    %v830 = vpop.f32.mrb[0].mxu0
    %831 = vdwg.mxu0
    %v832 = vmax.f32 %v829, 0.0
    %v834 = vsel %vm462, %v832, 0
    %836 = vmatprep.subr.mxu0 0.0
    %837 = vmatpush1.msra.mxu0 %v141
    %838 = vmatprep.subr.mxu0 0.0
    %839 = vmatpush1.msra.mxu0 %v146
    %840 = vmatprep.subr.mxu0 0.0
    %841 = vmatpush1.msra.mxu0 %v151
    %842 = vmatprep.subr.mxu0 0.0
    %843 = vmatpush1.msra.mxu0 %v156
    %844 = vmatprep.subr.mxu0 0.0
    %845 = vmatpush1.msra.mxu0 0.0
    %846 = vmatprep.subr.mxu0 0.0
    %847 = vmatpush1.msra.mxu0 0.0
    %848 = vmatprep.subr.mxu0 0.0
    %849 = vmatpush1.msra.mxu0 0.0
    %850 = vmatprep.subr.mxu0 0.0
    %851 = vmatpush1.msra.mxu0 0.0
    %852 = vmatprep.subr.mxu0 0.0
    %853 = vmatpush1.msra.mxu0 0.0
    %854 = vmatprep.subr.mxu0 0.0
    %855 = vmatpush1.msra.mxu0 0.0
    %856 = vmatprep.subr.mxu0 0.0
    %857 = vmatpush1.msra.mxu0 0.0
    %858 = vmatprep.subr.mxu0 0.0
    %859 = vmatpush1.msra.mxu0 0.0
    %860 = vmatprep.subr.mxu0 0.0
    %861 = vmatpush1.msra.mxu0 0.0
    %862 = vmatprep.subr.mxu0 0.0
    %863 = vmatpush1.msra.mxu0 0.0
    %864 = vmatprep.subr.mxu0 0.0
    %865 = vmatpush1.msra.mxu0 0.0
    %866 = vmatprep.subr.mxu0 0.0
    %867 = vmatpush1.msra.mxu0 0.0
    %868 = vmatprep.subr.mxu0 0.0
    %869 = vmatpush1.msra.mxu0 0.0
    %870 = vmatprep.subr.mxu0 0.0
    %871 = vmatpush1.msra.mxu0 0.0
    %872 = vmatprep.subr.mxu0 0.0
    %873 = vmatpush1.msra.mxu0 0.0
    %874 = vmatprep.subr.mxu0 0.0
    %875 = vmatpush1.msra.mxu0 0.0
    %876 = vmatprep.subr.mxu0 0.0
    %877 = vmatpush1.msra.mxu0 0.0
    %878 = vmatprep.subr.mxu0 0.0
    %879 = vmatpush1.msra.mxu0 0.0
    %880 = vmatprep.subr.mxu0 0.0
    %881 = vmatpush1.msra.mxu0 0.0
    %882 = vmatprep.subr.mxu0 0.0
    %883 = vmatpush1.msra.mxu0 0.0
    %884 = vmatprep.subr.mxu0 0.0
    %885 = vmatpush1.msra.mxu0 0.0
    %886 = vmatprep.subr.mxu0 0.0
    %887 = vmatpush1.msra.mxu0 0.0
    %888 = vmatprep.subr.mxu0 0.0
    %889 = vmatpush1.msra.mxu0 0.0
    %890 = vmatprep.subr.mxu0 0.0
    %891 = vmatpush1.msra.mxu0 0.0
    %892 = vmatprep.subr.mxu0 0.0
    %893 = vmatpush1.msra.mxu0 0.0
    %894 = vmatprep.subr.mxu0 0.0
    %895 = vmatpush1.msra.mxu0 0.0
    %896 = vmatprep.subr.mxu0 0.0
    %897 = vmatpush1.msra.mxu0 0.0
    %898 = vmatprep.subr.mxu0 0.0
    %899 = vmatpush1.msra.mxu0 0.0
    %900 = vmatprep.mubr.f32.mxu0 0.0
    %901 = vmatmul.mubr.f32.gmra.mrb[0].mxu0 %v834
    %v902 = vpop.f32.mrb[0].mxu0
    %v903 = vadd.f32 %v449, %v902
    %v904 = vpop.f32.mrb[0].mxu0
    %905 = vdwg.mxu0
    %v906 = vmax.f32 %v903, 0.0
    %v908 = vsel %vm462, %v906, 0
    %910 = vmatprep.subr.mxu0 0.0
    %911 = vmatpush1.msra.mxu0 %v52
    %912 = vmatprep.subr.mxu0 0.0
    %913 = vmatpush1.msra.mxu0 %v53
    %914 = vmatprep.subr.mxu0 0.0
    %915 = vmatpush1.msra.mxu0 %v54
    %916 = vmatprep.subr.mxu0 0.0
    %917 = vmatpush1.msra.mxu0 %v55
    %918 = vmatprep.subr.mxu0 0.0
    %919 = vmatpush1.msra.mxu0 0.0
    %920 = vmatprep.subr.mxu0 0.0
    %921 = vmatpush1.msra.mxu0 0.0
    %922 = vmatprep.subr.mxu0 0.0
    %923 = vmatpush1.msra.mxu0 0.0
    %924 = vmatprep.subr.mxu0 0.0
    %925 = vmatpush1.msra.mxu0 0.0
    %926 = vmatprep.subr.mxu0 0.0
    %927 = vmatpush1.msra.mxu0 0.0
    %928 = vmatprep.subr.mxu0 0.0
    %929 = vmatpush1.msra.mxu0 0.0
    %930 = vmatprep.subr.mxu0 0.0
    %931 = vmatpush1.msra.mxu0 0.0
    %932 = vmatprep.subr.mxu0 0.0
    %933 = vmatpush1.msra.mxu0 0.0
    %934 = vmatprep.subr.mxu0 0.0
    %935 = vmatpush1.msra.mxu0 0.0
    %936 = vmatprep.subr.mxu0 0.0
    %937 = vmatpush1.msra.mxu0 0.0
    %938 = vmatprep.subr.mxu0 0.0
    %939 = vmatpush1.msra.mxu0 0.0
    %940 = vmatprep.subr.mxu0 0.0
    %941 = vmatpush1.msra.mxu0 0.0
    %942 = vmatprep.subr.mxu0 0.0
    %943 = vmatpush1.msra.mxu0 0.0
    %944 = vmatprep.subr.mxu0 0.0
    %945 = vmatpush1.msra.mxu0 0.0
    %946 = vmatprep.subr.mxu0 0.0
    %947 = vmatpush1.msra.mxu0 0.0
    %948 = vmatprep.subr.mxu0 0.0
    %949 = vmatpush1.msra.mxu0 0.0
    %950 = vmatprep.subr.mxu0 0.0
    %951 = vmatpush1.msra.mxu0 0.0
    %952 = vmatprep.subr.mxu0 0.0
    %953 = vmatpush1.msra.mxu0 0.0
    %954 = vmatprep.subr.mxu0 0.0
    %955 = vmatpush1.msra.mxu0 0.0
    %956 = vmatprep.subr.mxu0 0.0
    %957 = vmatpush1.msra.mxu0 0.0
    %958 = vmatprep.subr.mxu0 0.0
    %959 = vmatpush1.msra.mxu0 0.0
    %960 = vmatprep.subr.mxu0 0.0
    %961 = vmatpush1.msra.mxu0 0.0
    %962 = vmatprep.subr.mxu0 0.0
    %963 = vmatpush1.msra.mxu0 0.0
    %964 = vmatprep.subr.mxu0 0.0
    %965 = vmatpush1.msra.mxu0 0.0
    %966 = vmatprep.subr.mxu0 0.0
    %967 = vmatpush1.msra.mxu0 0.0
    %968 = vmatprep.subr.mxu0 0.0
    %969 = vmatpush1.msra.mxu0 0.0
    %970 = vmatprep.subr.mxu0 0.0
    %971 = vmatpush1.msra.mxu0 0.0
    %972 = vmatprep.subr.mxu0 0.0
    %973 = vmatpush1.msra.mxu0 0.0
    %974 = vmatprep.mubr.f32.mxu0 0.0
    %975 = vmatmul.mubr.f32.gmra.mrb[0].mxu0 %v908
    %v976 = vpop.f32.mrb[0].mxu0
    %v977 = vadd.f32 %v459, %v976
    %v978 = vpop.f32.mrb[0].mxu0
    %979 = vdwg.mxu0
    %v980 = vmax.f32 %v977, 0.0
    %v982 = vsel %vm462, %v980, 0
    %984 = vmatprep.subr.mxu0 0.0
    %985 = vmatpush1.msra.mxu0 %v141
    %986 = vmatprep.subr.mxu0 0.0
    %987 = vmatpush1.msra.mxu0 %v146
    %988 = vmatprep.subr.mxu0 0.0
    %989 = vmatpush1.msra.mxu0 %v151
    %990 = vmatprep.subr.mxu0 0.0
    %991 = vmatpush1.msra.mxu0 %v156
    %992 = vmatprep.subr.mxu0 0.0
    %993 = vmatpush1.msra.mxu0 0.0
    %994 = vmatprep.subr.mxu0 0.0
    %995 = vmatpush1.msra.mxu0 0.0
    %996 = vmatprep.subr.mxu0 0.0
    %997 = vmatpush1.msra.mxu0 0.0
    %998 = vmatprep.subr.mxu0 0.0
    %999 = vmatpush1.msra.mxu0 0.0
    %1000 = vmatprep.subr.mxu0 0.0
    %1001 = vmatpush1.msra.mxu0 0.0
    %1002 = vmatprep.subr.mxu0 0.0
    %1003 = vmatpush1.msra.mxu0 0.0
    %1004 = vmatprep.subr.mxu0 0.0
    %1005 = vmatpush1.msra.mxu0 0.0
    %1006 = vmatprep.subr.mxu0 0.0
    %1007 = vmatpush1.msra.mxu0 0.0
    %1008 = vmatprep.subr.mxu0 0.0
    %1009 = vmatpush1.msra.mxu0 0.0
    %1010 = vmatprep.subr.mxu0 0.0
    %1011 = vmatpush1.msra.mxu0 0.0
    %1012 = vmatprep.subr.mxu0 0.0
    %1013 = vmatpush1.msra.mxu0 0.0
    %1014 = vmatprep.subr.mxu0 0.0
    %1015 = vmatpush1.msra.mxu0 0.0
    %1016 = vmatprep.subr.mxu0 0.0
    %1017 = vmatpush1.msra.mxu0 0.0
    %1018 = vmatprep.subr.mxu0 0.0
    %1019 = vmatpush1.msra.mxu0 0.0
    %1020 = vmatprep.subr.mxu0 0.0
    %1021 = vmatpush1.msra.mxu0 0.0
    %1022 = vmatprep.subr.mxu0 0.0
    %1023 = vmatpush1.msra.mxu0 0.0
    %1024 = vmatprep.subr.mxu0 0.0
    %1025 = vmatpush1.msra.mxu0 0.0
    %1026 = vmatprep.subr.mxu0 0.0
    %1027 = vmatpush1.msra.mxu0 0.0
    %1028 = vmatprep.subr.mxu0 0.0
    %1029 = vmatpush1.msra.mxu0 0.0
    %1030 = vmatprep.subr.mxu0 0.0
    %1031 = vmatpush1.msra.mxu0 0.0
    %1032 = vmatprep.subr.mxu0 0.0
    %1033 = vmatpush1.msra.mxu0 0.0
    %1034 = vmatprep.subr.mxu0 0.0
    %1035 = vmatpush1.msra.mxu0 0.0
    %1036 = vmatprep.subr.mxu0 0.0
    %1037 = vmatpush1.msra.mxu0 0.0
    %1038 = vmatprep.subr.mxu0 0.0
    %1039 = vmatpush1.msra.mxu0 0.0
    %1040 = vmatprep.subr.mxu0 0.0
    %1041 = vmatpush1.msra.mxu0 0.0
    %1042 = vmatprep.subr.mxu0 0.0
    %1043 = vmatpush1.msra.mxu0 0.0
    %1044 = vmatprep.subr.mxu0 0.0
    %1045 = vmatpush1.msra.mxu0 0.0
    %1046 = vmatprep.subr.mxu0 0.0
    %1047 = vmatpush1.msra.mxu0 0.0
    %1048 = vmatprep.mubr.f32.mxu0 0.0
    %1049 = vmatmul.mubr.f32.gmra.mrb[0].mxu0 %v982
    %v1050 = vpop.f32.mrb[0].mxu0
    %v1051 = vadd.f32 %v450, %v1050
    %v1052 = vpop.f32.mrb[0].mxu0
    %1053 = vdwg.mxu0
    %v1054 = vmax.f32 %v1051, 0.0
    %v1056 = vsel %vm462, %v1054, 0
    %1058 = vmatprep.subr.mxu0 0.0
    %1059 = vmatpush1.msra.mxu0 %v52
    %1060 = vmatprep.subr.mxu0 0.0
    %1061 = vmatpush1.msra.mxu0 %v53
    %1062 = vmatprep.subr.mxu0 0.0
    %1063 = vmatpush1.msra.mxu0 %v54
    %1064 = vmatprep.subr.mxu0 0.0
    %1065 = vmatpush1.msra.mxu0 %v55
    %1066 = vmatprep.subr.mxu0 0.0
    %1067 = vmatpush1.msra.mxu0 0.0
    %1068 = vmatprep.subr.mxu0 0.0
    %1069 = vmatpush1.msra.mxu0 0.0
    %1070 = vmatprep.subr.mxu0 0.0
    %1071 = vmatpush1.msra.mxu0 0.0
    %1072 = vmatprep.subr.mxu0 0.0
    %1073 = vmatpush1.msra.mxu0 0.0
    %1074 = vmatprep.subr.mxu0 0.0
    %1075 = vmatpush1.msra.mxu0 0.0
    %1076 = vmatprep.subr.mxu0 0.0
    %1077 = vmatpush1.msra.mxu0 0.0
    %1078 = vmatprep.subr.mxu0 0.0
    %1079 = vmatpush1.msra.mxu0 0.0
    %1080 = vmatprep.subr.mxu0 0.0
    %1081 = vmatpush1.msra.mxu0 0.0
    %1082 = vmatprep.subr.mxu0 0.0
    %1083 = vmatpush1.msra.mxu0 0.0
    %1084 = vmatprep.subr.mxu0 0.0
    %1085 = vmatpush1.msra.mxu0 0.0
    %1086 = vmatprep.subr.mxu0 0.0
    %1087 = vmatpush1.msra.mxu0 0.0
    %1088 = vmatprep.subr.mxu0 0.0
    %1089 = vmatpush1.msra.mxu0 0.0
    %1090 = vmatprep.subr.mxu0 0.0
    %1091 = vmatpush1.msra.mxu0 0.0
    %1092 = vmatprep.subr.mxu0 0.0
    %1093 = vmatpush1.msra.mxu0 0.0
    %1094 = vmatprep.subr.mxu0 0.0
    %1095 = vmatpush1.msra.mxu0 0.0
    %1096 = vmatprep.subr.mxu0 0.0
    %1097 = vmatpush1.msra.mxu0 0.0
    %1098 = vmatprep.subr.mxu0 0.0
    %1099 = vmatpush1.msra.mxu0 0.0
    %1100 = vmatprep.subr.mxu0 0.0
    %1101 = vmatpush1.msra.mxu0 0.0
    %1102 = vmatprep.subr.mxu0 0.0
    %1103 = vmatpush1.msra.mxu0 0.0
    %1104 = vmatprep.subr.mxu0 0.0
    %1105 = vmatpush1.msra.mxu0 0.0
    %1106 = vmatprep.subr.mxu0 0.0
    %1107 = vmatpush1.msra.mxu0 0.0
    %1108 = vmatprep.subr.mxu0 0.0
    %1109 = vmatpush1.msra.mxu0 0.0
    %1110 = vmatprep.subr.mxu0 0.0
    %1111 = vmatpush1.msra.mxu0 0.0
    %1112 = vmatprep.subr.mxu0 0.0
    %1113 = vmatpush1.msra.mxu0 0.0
    %1114 = vmatprep.subr.mxu0 0.0
    %1115 = vmatpush1.msra.mxu0 0.0
    %1116 = vmatprep.subr.mxu0 0.0
    %1117 = vmatpush1.msra.mxu0 0.0
    %1118 = vmatprep.subr.mxu0 0.0
    %1119 = vmatpush1.msra.mxu0 0.0
    %1120 = vmatprep.subr.mxu0 0.0
    %1121 = vmatpush1.msra.mxu0 0.0
    %1122 = vmatprep.mubr.f32.mxu0 0.0
    %1123 = vmatmul.mubr.f32.gmra.mrb[0].mxu0 %v1056
    %v1124 = vpop.f32.mrb[0].mxu0
    %v1125 = vadd.f32 %v459, %v1124
    %v1126 = vpop.f32.mrb[0].mxu0
    %1127 = vdwg.mxu0
    %v1128 = vmax.f32 %v1125, 0.0
    %v1130 = vsel %vm462, %v1128, 0
    %1132 = vmatprep.subr.mxu0 0.0
    %1133 = vmatpush1.msra.mxu0 %v141
    %1134 = vmatprep.subr.mxu0 0.0
    %1135 = vmatpush1.msra.mxu0 %v146
    %1136 = vmatprep.subr.mxu0 0.0
    %1137 = vmatpush1.msra.mxu0 %v151
    %1138 = vmatprep.subr.mxu0 0.0
    %1139 = vmatpush1.msra.mxu0 %v156
    %1140 = vmatprep.subr.mxu0 0.0
    %1141 = vmatpush1.msra.mxu0 0.0
    %1142 = vmatprep.subr.mxu0 0.0
    %1143 = vmatpush1.msra.mxu0 0.0
    %1144 = vmatprep.subr.mxu0 0.0
    %1145 = vmatpush1.msra.mxu0 0.0
    %1146 = vmatprep.subr.mxu0 0.0
    %1147 = vmatpush1.msra.mxu0 0.0
    %1148 = vmatprep.subr.mxu0 0.0
    %1149 = vmatpush1.msra.mxu0 0.0
    %1150 = vmatprep.subr.mxu0 0.0
    %1151 = vmatpush1.msra.mxu0 0.0
    %1152 = vmatprep.subr.mxu0 0.0
    %1153 = vmatpush1.msra.mxu0 0.0
    %1154 = vmatprep.subr.mxu0 0.0
    %1155 = vmatpush1.msra.mxu0 0.0
    %1156 = vmatprep.subr.mxu0 0.0
    %1157 = vmatpush1.msra.mxu0 0.0
    %1158 = vmatprep.subr.mxu0 0.0
    %1159 = vmatpush1.msra.mxu0 0.0
    %1160 = vmatprep.subr.mxu0 0.0
    %1161 = vmatpush1.msra.mxu0 0.0
    %1162 = vmatprep.subr.mxu0 0.0
    %1163 = vmatpush1.msra.mxu0 0.0
    %1164 = vmatprep.subr.mxu0 0.0
    %1165 = vmatpush1.msra.mxu0 0.0
    %1166 = vmatprep.subr.mxu0 0.0
    %1167 = vmatpush1.msra.mxu0 0.0
    %1168 = vmatprep.subr.mxu0 0.0
    %1169 = vmatpush1.msra.mxu0 0.0
    %1170 = vmatprep.subr.mxu0 0.0
    %1171 = vmatpush1.msra.mxu0 0.0
    %1172 = vmatprep.subr.mxu0 0.0
    %1173 = vmatpush1.msra.mxu0 0.0
    %1174 = vmatprep.subr.mxu0 0.0
    %1175 = vmatpush1.msra.mxu0 0.0
    %1176 = vmatprep.subr.mxu0 0.0
    %1177 = vmatpush1.msra.mxu0 0.0
    %1178 = vmatprep.subr.mxu0 0.0
    %1179 = vmatpush1.msra.mxu0 0.0
    %1180 = vmatprep.subr.mxu0 0.0
    %1181 = vmatpush1.msra.mxu0 0.0
    %1182 = vmatprep.subr.mxu0 0.0
    %1183 = vmatpush1.msra.mxu0 0.0
    %1184 = vmatprep.subr.mxu0 0.0
    %1185 = vmatpush1.msra.mxu0 0.0
    %1186 = vmatprep.subr.mxu0 0.0
    %1187 = vmatpush1.msra.mxu0 0.0
    %1188 = vmatprep.subr.mxu0 0.0
    %1189 = vmatpush1.msra.mxu0 0.0
    %1190 = vmatprep.subr.mxu0 0.0
    %1191 = vmatpush1.msra.mxu0 0.0
    %1192 = vmatprep.subr.mxu0 0.0
    %1193 = vmatpush1.msra.mxu0 0.0
    %1194 = vmatprep.subr.mxu0 0.0
    %1195 = vmatpush1.msra.mxu0 0.0
    %1196 = vmatprep.mubr.f32.mxu0 0.0
    %1197 = vmatmul.mubr.f32.gmra.mrb[0].mxu0 %v1130
    %v1198 = vpop.f32.mrb[0].mxu0
    %v1199 = vadd.f32 %v451, %v1198
    %v1200 = vpop.f32.mrb[0].mxu0
    %1201 = vdwg.mxu0
    %v1202 = vmax.f32 %v1199, 0.0
    %v1204 = vsel %vm462, %v1202, 0
    %1206 = vmatprep.subr.mxu0 0.0
    %1207 = vmatpush1.msra.mxu0 %v52
    %1208 = vmatprep.subr.mxu0 0.0
    %1209 = vmatpush1.msra.mxu0 %v53
    %1210 = vmatprep.subr.mxu0 0.0
    %1211 = vmatpush1.msra.mxu0 %v54
    %1212 = vmatprep.subr.mxu0 0.0
    %1213 = vmatpush1.msra.mxu0 %v55
    %1214 = vmatprep.subr.mxu0 0.0
    %1215 = vmatpush1.msra.mxu0 0.0
    %1216 = vmatprep.subr.mxu0 0.0
    %1217 = vmatpush1.msra.mxu0 0.0
    %1218 = vmatprep.subr.mxu0 0.0
    %1219 = vmatpush1.msra.mxu0 0.0
    %1220 = vmatprep.subr.mxu0 0.0
    %1221 = vmatpush1.msra.mxu0 0.0
    %1222 = vmatprep.subr.mxu0 0.0
    %1223 = vmatpush1.msra.mxu0 0.0
    %1224 = vmatprep.subr.mxu0 0.0
    %1225 = vmatpush1.msra.mxu0 0.0
    %1226 = vmatprep.subr.mxu0 0.0
    %1227 = vmatpush1.msra.mxu0 0.0
    %1228 = vmatprep.subr.mxu0 0.0
    %1229 = vmatpush1.msra.mxu0 0.0
    %1230 = vmatprep.subr.mxu0 0.0
    %1231 = vmatpush1.msra.mxu0 0.0
    %1232 = vmatprep.subr.mxu0 0.0
    %1233 = vmatpush1.msra.mxu0 0.0
    %1234 = vmatprep.subr.mxu0 0.0
    %1235 = vmatpush1.msra.mxu0 0.0
    %1236 = vmatprep.subr.mxu0 0.0
    %1237 = vmatpush1.msra.mxu0 0.0
    %1238 = vmatprep.subr.mxu0 0.0
    %1239 = vmatpush1.msra.mxu0 0.0
    %1240 = vmatprep.subr.mxu0 0.0
    %1241 = vmatpush1.msra.mxu0 0.0
    %1242 = vmatprep.subr.mxu0 0.0
    %1243 = vmatpush1.msra.mxu0 0.0
    %1244 = vmatprep.subr.mxu0 0.0
    %1245 = vmatpush1.msra.mxu0 0.0
    %1246 = vmatprep.subr.mxu0 0.0
    %1247 = vmatpush1.msra.mxu0 0.0
    %1248 = vmatprep.subr.mxu0 0.0
    %1249 = vmatpush1.msra.mxu0 0.0
    %1250 = vmatprep.subr.mxu0 0.0
    %1251 = vmatpush1.msra.mxu0 0.0
    %1252 = vmatprep.subr.mxu0 0.0
    %1253 = vmatpush1.msra.mxu0 0.0
    %1254 = vmatprep.subr.mxu0 0.0
    %1255 = vmatpush1.msra.mxu0 0.0
    %1256 = vmatprep.subr.mxu0 0.0
    %1257 = vmatpush1.msra.mxu0 0.0
    %1258 = vmatprep.subr.mxu0 0.0
    %1259 = vmatpush1.msra.mxu0 0.0
    %1260 = vmatprep.subr.mxu0 0.0
    %1261 = vmatpush1.msra.mxu0 0.0
    %1262 = vmatprep.subr.mxu0 0.0
    %1263 = vmatpush1.msra.mxu0 0.0
    %1264 = vmatprep.subr.mxu0 0.0
    %1265 = vmatpush1.msra.mxu0 0.0
    %1266 = vmatprep.subr.mxu0 0.0
    %1267 = vmatpush1.msra.mxu0 0.0
    %1268 = vmatprep.subr.mxu0 0.0
    %1269 = vmatpush1.msra.mxu0 0.0
    %1270 = vmatprep.mubr.f32.mxu0 0.0
    %1271 = vmatmul.mubr.f32.gmra.mrb[0].mxu0 %v1204
    %v1272 = vpop.f32.mrb[0].mxu0
    %v1273 = vadd.f32 %v459, %v1272
    %v1274 = vpop.f32.mrb[0].mxu0
    %1275 = vdwg.mxu0
    %v1276 = vmax.f32 %v1273, 0.0
    %v1278 = vsel %vm462, %v1276, 0
    %1280 = vmatprep.subr.mxu0 0.0
    %1281 = vmatpush1.msra.mxu0 %v141
    %1282 = vmatprep.subr.mxu0 0.0
    %1283 = vmatpush1.msra.mxu0 %v146
    %1284 = vmatprep.subr.mxu0 0.0
    %1285 = vmatpush1.msra.mxu0 %v151
    %1286 = vmatprep.subr.mxu0 0.0
    %1287 = vmatpush1.msra.mxu0 %v156
    %1288 = vmatprep.subr.mxu0 0.0
    %1289 = vmatpush1.msra.mxu0 0.0
    %1290 = vmatprep.subr.mxu0 0.0
    %1291 = vmatpush1.msra.mxu0 0.0
    %1292 = vmatprep.subr.mxu0 0.0
    %1293 = vmatpush1.msra.mxu0 0.0
    %1294 = vmatprep.subr.mxu0 0.0
    %1295 = vmatpush1.msra.mxu0 0.0
    %1296 = vmatprep.subr.mxu0 0.0
    %1297 = vmatpush1.msra.mxu0 0.0
    %1298 = vmatprep.subr.mxu0 0.0
    %1299 = vmatpush1.msra.mxu0 0.0
    %1300 = vmatprep.subr.mxu0 0.0
    %1301 = vmatpush1.msra.mxu0 0.0
    %1302 = vmatprep.subr.mxu0 0.0
    %1303 = vmatpush1.msra.mxu0 0.0
    %1304 = vmatprep.subr.mxu0 0.0
    %1305 = vmatpush1.msra.mxu0 0.0
    %1306 = vmatprep.subr.mxu0 0.0
    %1307 = vmatpush1.msra.mxu0 0.0
    %1308 = vmatprep.subr.mxu0 0.0
    %1309 = vmatpush1.msra.mxu0 0.0
    %1310 = vmatprep.subr.mxu0 0.0
    %1311 = vmatpush1.msra.mxu0 0.0
    %1312 = vmatprep.subr.mxu0 0.0
    %1313 = vmatpush1.msra.mxu0 0.0
    %1314 = vmatprep.subr.mxu0 0.0
    %1315 = vmatpush1.msra.mxu0 0.0
    %1316 = vmatprep.subr.mxu0 0.0
    %1317 = vmatpush1.msra.mxu0 0.0
    %1318 = vmatprep.subr.mxu0 0.0
    %1319 = vmatpush1.msra.mxu0 0.0
    %1320 = vmatprep.subr.mxu0 0.0
    %1321 = vmatpush1.msra.mxu0 0.0
    %1322 = vmatprep.subr.mxu0 0.0
    %1323 = vmatpush1.msra.mxu0 0.0
    %1324 = vmatprep.subr.mxu0 0.0
    %1325 = vmatpush1.msra.mxu0 0.0
    %1326 = vmatprep.subr.mxu0 0.0
    %1327 = vmatpush1.msra.mxu0 0.0
    %1328 = vmatprep.subr.mxu0 0.0
    %1329 = vmatpush1.msra.mxu0 0.0
    %1330 = vmatprep.subr.mxu0 0.0
    %1331 = vmatpush1.msra.mxu0 0.0
    %1332 = vmatprep.subr.mxu0 0.0
    %1333 = vmatpush1.msra.mxu0 0.0
    %1334 = vmatprep.subr.mxu0 0.0
    %1335 = vmatpush1.msra.mxu0 0.0
    %1336 = vmatprep.subr.mxu0 0.0
    %1337 = vmatpush1.msra.mxu0 0.0
    %1338 = vmatprep.subr.mxu0 0.0
    %1339 = vmatpush1.msra.mxu0 0.0
    %1340 = vmatprep.subr.mxu0 0.0
    %1341 = vmatpush1.msra.mxu0 0.0
    %1342 = vmatprep.subr.mxu0 0.0
    %1343 = vmatpush1.msra.mxu0 0.0
    %1344 = vmatprep.mubr.f32.mxu0 0.0
    %1345 = vmatmul.mubr.f32.gmra.mrb[0].mxu0 %v1278
    %v1346 = vpop.f32.mrb[0].mxu0
    %v1347 = vadd.f32 %v452, %v1346
    %v1348 = vpop.f32.mrb[0].mxu0
    %1349 = vdwg.mxu0
    %v1350 = vmax.f32 %v1347, 0.0
    %v1352 = vsel %vm462, %v1350, 0
    %1354 = vmatprep.subr.mxu0 0.0
    %1355 = vmatpush1.msra.mxu0 %v52
    %1356 = vmatprep.subr.mxu0 0.0
    %1357 = vmatpush1.msra.mxu0 %v53
    %1358 = vmatprep.subr.mxu0 0.0
    %1359 = vmatpush1.msra.mxu0 %v54
    %1360 = vmatprep.subr.mxu0 0.0
    %1361 = vmatpush1.msra.mxu0 %v55
    %1362 = vmatprep.subr.mxu0 0.0
    %1363 = vmatpush1.msra.mxu0 0.0
    %1364 = vmatprep.subr.mxu0 0.0
    %1365 = vmatpush1.msra.mxu0 0.0
    %1366 = vmatprep.subr.mxu0 0.0
    %1367 = vmatpush1.msra.mxu0 0.0
    %1368 = vmatprep.subr.mxu0 0.0
    %1369 = vmatpush1.msra.mxu0 0.0
    %1370 = vmatprep.subr.mxu0 0.0
    %1371 = vmatpush1.msra.mxu0 0.0
    %1372 = vmatprep.subr.mxu0 0.0
    %1373 = vmatpush1.msra.mxu0 0.0
    %1374 = vmatprep.subr.mxu0 0.0
    %1375 = vmatpush1.msra.mxu0 0.0
    %1376 = vmatprep.subr.mxu0 0.0
    %1377 = vmatpush1.msra.mxu0 0.0
    %1378 = vmatprep.subr.mxu0 0.0
    %1379 = vmatpush1.msra.mxu0 0.0
    %1380 = vmatprep.subr.mxu0 0.0
    %1381 = vmatpush1.msra.mxu0 0.0
    %1382 = vmatprep.subr.mxu0 0.0
    %1383 = vmatpush1.msra.mxu0 0.0
    %1384 = vmatprep.subr.mxu0 0.0
    %1385 = vmatpush1.msra.mxu0 0.0
    %1386 = vmatprep.subr.mxu0 0.0
    %1387 = vmatpush1.msra.mxu0 0.0
    %1388 = vmatprep.subr.mxu0 0.0
    %1389 = vmatpush1.msra.mxu0 0.0
    %1390 = vmatprep.subr.mxu0 0.0
    %1391 = vmatpush1.msra.mxu0 0.0
    %1392 = vmatprep.subr.mxu0 0.0
    %1393 = vmatpush1.msra.mxu0 0.0
    %1394 = vmatprep.subr.mxu0 0.0
    %1395 = vmatpush1.msra.mxu0 0.0
    %1396 = vmatprep.subr.mxu0 0.0
    %1397 = vmatpush1.msra.mxu0 0.0
    %1398 = vmatprep.subr.mxu0 0.0
    %1399 = vmatpush1.msra.mxu0 0.0
    %1400 = vmatprep.subr.mxu0 0.0
    %1401 = vmatpush1.msra.mxu0 0.0
    %1402 = vmatprep.subr.mxu0 0.0
    %1403 = vmatpush1.msra.mxu0 0.0
    %1404 = vmatprep.subr.mxu0 0.0
    %1405 = vmatpush1.msra.mxu0 0.0
    %1406 = vmatprep.subr.mxu0 0.0
    %1407 = vmatpush1.msra.mxu0 0.0
    %1408 = vmatprep.subr.mxu0 0.0
    %1409 = vmatpush1.msra.mxu0 0.0
    %1410 = vmatprep.subr.mxu0 0.0
    %1411 = vmatpush1.msra.mxu0 0.0
    %1412 = vmatprep.subr.mxu0 0.0
    %1413 = vmatpush1.msra.mxu0 0.0
    %1414 = vmatprep.subr.mxu0 0.0
    %1415 = vmatpush1.msra.mxu0 0.0
    %1416 = vmatprep.subr.mxu0 0.0
    %1417 = vmatpush1.msra.mxu0 0.0
    %1418 = vmatprep.mubr.f32.mxu0 0.0
    %1419 = vmatmul.mubr.f32.gmra.mrb[0].mxu0 %v1352
    %v1420 = vpop.f32.mrb[0].mxu0
    %v1421 = vadd.f32 %v459, %v1420
    %v1422 = vpop.f32.mrb[0].mxu0
    %1423 = vdwg.mxu0
    %v1424 = vmax.f32 %v1421, 0.0
    %v1426 = vsel %vm462, %v1424, 0
    %1428 = vmatprep.subr.mxu0 0.0
    %1429 = vmatpush1.msra.mxu0 %v141
    %1430 = vmatprep.subr.mxu0 0.0
    %1431 = vmatpush1.msra.mxu0 %v146
    %1432 = vmatprep.subr.mxu0 0.0
    %1433 = vmatpush1.msra.mxu0 %v151
    %1434 = vmatprep.subr.mxu0 0.0
    %1435 = vmatpush1.msra.mxu0 %v156
    %1436 = vmatprep.subr.mxu0 0.0
    %1437 = vmatpush1.msra.mxu0 0.0
    %1438 = vmatprep.subr.mxu0 0.0
    %1439 = vmatpush1.msra.mxu0 0.0
    %1440 = vmatprep.subr.mxu0 0.0
    %1441 = vmatpush1.msra.mxu0 0.0
    %1442 = vmatprep.subr.mxu0 0.0
    %1443 = vmatpush1.msra.mxu0 0.0
    %1444 = vmatprep.subr.mxu0 0.0
    %1445 = vmatpush1.msra.mxu0 0.0
    %1446 = vmatprep.subr.mxu0 0.0
    %1447 = vmatpush1.msra.mxu0 0.0
    %1448 = vmatprep.subr.mxu0 0.0
    %1449 = vmatpush1.msra.mxu0 0.0
    %1450 = vmatprep.subr.mxu0 0.0
    %1451 = vmatpush1.msra.mxu0 0.0
    %1452 = vmatprep.subr.mxu0 0.0
    %1453 = vmatpush1.msra.mxu0 0.0
    %1454 = vmatprep.subr.mxu0 0.0
    %1455 = vmatpush1.msra.mxu0 0.0
    %1456 = vmatprep.subr.mxu0 0.0
    %1457 = vmatpush1.msra.mxu0 0.0
    %1458 = vmatprep.subr.mxu0 0.0
    %1459 = vmatpush1.msra.mxu0 0.0
    %1460 = vmatprep.subr.mxu0 0.0
    %1461 = vmatpush1.msra.mxu0 0.0
    %1462 = vmatprep.subr.mxu0 0.0
    %1463 = vmatpush1.msra.mxu0 0.0
    %1464 = vmatprep.subr.mxu0 0.0
    %1465 = vmatpush1.msra.mxu0 0.0
    %1466 = vmatprep.subr.mxu0 0.0
    %1467 = vmatpush1.msra.mxu0 0.0
    %1468 = vmatprep.subr.mxu0 0.0
    %1469 = vmatpush1.msra.mxu0 0.0
    %1470 = vmatprep.subr.mxu0 0.0
    %1471 = vmatpush1.msra.mxu0 0.0
    %1472 = vmatprep.subr.mxu0 0.0
    %1473 = vmatpush1.msra.mxu0 0.0
    %1474 = vmatprep.subr.mxu0 0.0
    %1475 = vmatpush1.msra.mxu0 0.0
    %1476 = vmatprep.subr.mxu0 0.0
    %1477 = vmatpush1.msra.mxu0 0.0
    %1478 = vmatprep.subr.mxu0 0.0
    %1479 = vmatpush1.msra.mxu0 0.0
    %1480 = vmatprep.subr.mxu0 0.0
    %1481 = vmatpush1.msra.mxu0 0.0
    %1482 = vmatprep.subr.mxu0 0.0
    %1483 = vmatpush1.msra.mxu0 0.0
    %1484 = vmatprep.subr.mxu0 0.0
    %1485 = vmatpush1.msra.mxu0 0.0
    %1486 = vmatprep.subr.mxu0 0.0
    %1487 = vmatpush1.msra.mxu0 0.0
    %1488 = vmatprep.subr.mxu0 0.0
    %1489 = vmatpush1.msra.mxu0 0.0
    %1490 = vmatprep.subr.mxu0 0.0
    %1491 = vmatpush1.msra.mxu0 0.0
    %1492 = vmatprep.mubr.f32.mxu0 0.0
    %1493 = vmatmul.mubr.f32.gmra.mrb[0].mxu0 %v1426
    %v1494 = vpop.f32.mrb[0].mxu0
    %v1495 = vadd.f32 %v453, %v1494
    %v1496 = vpop.f32.mrb[0].mxu0
    %1497 = vdwg.mxu0
    %v1498 = vmax.f32 %v1495, 0.0
    %v1500 = vsel %vm462, %v1498, 0
    %1502 = vmatprep.subr.mxu0 0.0
    %1503 = vmatpush1.msra.mxu0 %v52
    %1504 = vmatprep.subr.mxu0 0.0
    %1505 = vmatpush1.msra.mxu0 %v53
    %1506 = vmatprep.subr.mxu0 0.0
    %1507 = vmatpush1.msra.mxu0 %v54
    %1508 = vmatprep.subr.mxu0 0.0
    %1509 = vmatpush1.msra.mxu0 %v55
    %1510 = vmatprep.subr.mxu0 0.0
    %1511 = vmatpush1.msra.mxu0 0.0
    %1512 = vmatprep.subr.mxu0 0.0
    %1513 = vmatpush1.msra.mxu0 0.0
    %1514 = vmatprep.subr.mxu0 0.0
    %1515 = vmatpush1.msra.mxu0 0.0
    %1516 = vmatprep.subr.mxu0 0.0
    %1517 = vmatpush1.msra.mxu0 0.0
    %1518 = vmatprep.subr.mxu0 0.0
    %1519 = vmatpush1.msra.mxu0 0.0
    %1520 = vmatprep.subr.mxu0 0.0
    %1521 = vmatpush1.msra.mxu0 0.0
    %1522 = vmatprep.subr.mxu0 0.0
    %1523 = vmatpush1.msra.mxu0 0.0
    %1524 = vmatprep.subr.mxu0 0.0
    %1525 = vmatpush1.msra.mxu0 0.0
    %1526 = vmatprep.subr.mxu0 0.0
    %1527 = vmatpush1.msra.mxu0 0.0
    %1528 = vmatprep.subr.mxu0 0.0
    %1529 = vmatpush1.msra.mxu0 0.0
    %1530 = vmatprep.subr.mxu0 0.0
    %1531 = vmatpush1.msra.mxu0 0.0
    %1532 = vmatprep.subr.mxu0 0.0
    %1533 = vmatpush1.msra.mxu0 0.0
    %1534 = vmatprep.subr.mxu0 0.0
    %1535 = vmatpush1.msra.mxu0 0.0
    %1536 = vmatprep.subr.mxu0 0.0
    %1537 = vmatpush1.msra.mxu0 0.0
    %1538 = vmatprep.subr.mxu0 0.0
    %1539 = vmatpush1.msra.mxu0 0.0
    %1540 = vmatprep.subr.mxu0 0.0
    %1541 = vmatpush1.msra.mxu0 0.0
    %1542 = vmatprep.subr.mxu0 0.0
    %1543 = vmatpush1.msra.mxu0 0.0
    %1544 = vmatprep.subr.mxu0 0.0
    %1545 = vmatpush1.msra.mxu0 0.0
    %1546 = vmatprep.subr.mxu0 0.0
    %1547 = vmatpush1.msra.mxu0 0.0
    %1548 = vmatprep.subr.mxu0 0.0
    %1549 = vmatpush1.msra.mxu0 0.0
    %1550 = vmatprep.subr.mxu0 0.0
    %1551 = vmatpush1.msra.mxu0 0.0
    %1552 = vmatprep.subr.mxu0 0.0
    %1553 = vmatpush1.msra.mxu0 0.0
    %1554 = vmatprep.subr.mxu0 0.0
    %1555 = vmatpush1.msra.mxu0 0.0
    %1556 = vmatprep.subr.mxu0 0.0
    %1557 = vmatpush1.msra.mxu0 0.0
    %1558 = vmatprep.subr.mxu0 0.0
    %1559 = vmatpush1.msra.mxu0 0.0
    %1560 = vmatprep.subr.mxu0 0.0
    %1561 = vmatpush1.msra.mxu0 0.0
    %1562 = vmatprep.subr.mxu0 0.0
    %1563 = vmatpush1.msra.mxu0 0.0
    %1564 = vmatprep.subr.mxu0 0.0
    %1565 = vmatpush1.msra.mxu0 0.0
    %1566 = vmatprep.mubr.f32.mxu0 0.0
    %1567 = vmatmul.mubr.f32.gmra.mrb[0].mxu0 %v1500
    %v1568 = vpop.f32.mrb[0].mxu0
    %v1569 = vadd.f32 %v459, %v1568
    %v1570 = vpop.f32.mrb[0].mxu0
    %1571 = vdwg.mxu0
    %v1572 = vmax.f32 %v1569, 0.0
    %v1573 = vlaneseq
    %v1574 = vshrl.u32 %v1573, 7
    %v1575 = vsub.s32 0, %v1574
    %v1576 = vrot.slane %v60, %v1575
    %v1579 = vsel %vm462, %v1572, 0
    %1581 = vmatprep.subr.mxu0 0.0
    %1582 = vmatpush1.msra.mxu0 %v56
    %1583 = vmatprep.subr.mxu0 0.0
    %1584 = vmatpush1.msra.mxu0 %v57
    %1585 = vmatprep.subr.mxu0 0.0
    %1586 = vmatpush1.msra.mxu0 %v58
    %1587 = vmatprep.subr.mxu0 0.0
    %1588 = vmatpush1.msra.mxu0 %v59
    %1589 = vmatprep.subr.mxu0 0.0
    %1590 = vmatpush1.msra.mxu0 0.0
    %1591 = vmatprep.subr.mxu0 0.0
    %1592 = vmatpush1.msra.mxu0 0.0
    %1593 = vmatprep.subr.mxu0 0.0
    %1594 = vmatpush1.msra.mxu0 0.0
    %1595 = vmatprep.subr.mxu0 0.0
    %1596 = vmatpush1.msra.mxu0 0.0
    %1597 = vmatprep.subr.mxu0 0.0
    %1598 = vmatpush1.msra.mxu0 0.0
    %1599 = vmatprep.subr.mxu0 0.0
    %1600 = vmatpush1.msra.mxu0 0.0
    %1601 = vmatprep.subr.mxu0 0.0
    %1602 = vmatpush1.msra.mxu0 0.0
    %1603 = vmatprep.subr.mxu0 0.0
    %1604 = vmatpush1.msra.mxu0 0.0
    %1605 = vmatprep.subr.mxu0 0.0
    %1606 = vmatpush1.msra.mxu0 0.0
    %1607 = vmatprep.subr.mxu0 0.0
    %1608 = vmatpush1.msra.mxu0 0.0
    %1609 = vmatprep.subr.mxu0 0.0
    %1610 = vmatpush1.msra.mxu0 0.0
    %1611 = vmatprep.subr.mxu0 0.0
    %1612 = vmatpush1.msra.mxu0 0.0
    %1613 = vmatprep.subr.mxu0 0.0
    %1614 = vmatpush1.msra.mxu0 0.0
    %1615 = vmatprep.subr.mxu0 0.0
    %1616 = vmatpush1.msra.mxu0 0.0
    %1617 = vmatprep.subr.mxu0 0.0
    %1618 = vmatpush1.msra.mxu0 0.0
    %1619 = vmatprep.subr.mxu0 0.0
    %1620 = vmatpush1.msra.mxu0 0.0
    %1621 = vmatprep.subr.mxu0 0.0
    %1622 = vmatpush1.msra.mxu0 0.0
    %1623 = vmatprep.subr.mxu0 0.0
    %1624 = vmatpush1.msra.mxu0 0.0
    %1625 = vmatprep.subr.mxu0 0.0
    %1626 = vmatpush1.msra.mxu0 0.0
    %1627 = vmatprep.subr.mxu0 0.0
    %1628 = vmatpush1.msra.mxu0 0.0
    %1629 = vmatprep.subr.mxu0 0.0
    %1630 = vmatpush1.msra.mxu0 0.0
    %1631 = vmatprep.subr.mxu0 0.0
    %1632 = vmatpush1.msra.mxu0 0.0
    %1633 = vmatprep.subr.mxu0 0.0
    %1634 = vmatpush1.msra.mxu0 0.0
    %1635 = vmatprep.subr.mxu0 0.0
    %1636 = vmatpush1.msra.mxu0 0.0
    %1637 = vmatprep.subr.mxu0 0.0
    %1638 = vmatpush1.msra.mxu0 0.0
    %1639 = vmatprep.subr.mxu0 0.0
    %1640 = vmatpush1.msra.mxu0 0.0
    %1641 = vmatprep.subr.mxu0 0.0
    %1642 = vmatpush1.msra.mxu0 0.0
    %1643 = vmatprep.subr.mxu0 0.0
    %1644 = vmatpush1.msra.mxu0 0.0
    %1645 = vmatprep.mubr.f32.mxu0 0.0
    %1646 = vmatmul.mubr.f32.gmra.mrb[0].mxu0 %v538
    %v1647 = vpop.f32.mrb[0].mxu0
    %v1648 = vadd.f32 %v1576, %v1647
    %v1649 = vpop.f32.mrb[0].mxu0
    %1650 = vmatprep.mubr.f32.mxu0 0.0
    %1651 = vmatmul.mubr.f32.gmra.mrb[0].mxu0 %v686
    %v1652 = vpop.f32.mrb[0].mxu0
    %v1653 = vadd.f32 %v1576, %v1652
    %v1654 = vpop.f32.mrb[0].mxu0
    %1655 = vmatprep.mubr.f32.mxu0 0.0
    %1656 = vmatmul.mubr.f32.gmra.mrb[0].mxu0 %v834
    %v1657 = vpop.f32.mrb[0].mxu0
    %v1658 = vadd.f32 %v1576, %v1657
    %v1659 = vpop.f32.mrb[0].mxu0
    %1660 = vmatprep.mubr.f32.mxu0 0.0
    %1661 = vmatmul.mubr.f32.gmra.mrb[0].mxu0 %v982
    %v1662 = vpop.f32.mrb[0].mxu0
    %v1663 = vadd.f32 %v1576, %v1662
    %v1664 = vpop.f32.mrb[0].mxu0
    %1665 = vmatprep.mubr.f32.mxu0 0.0
    %1666 = vmatmul.mubr.f32.gmra.mrb[0].mxu0 %v1130
    %v1667 = vpop.f32.mrb[0].mxu0
    %v1668 = vadd.f32 %v1576, %v1667
    %v1669 = vpop.f32.mrb[0].mxu0
    %1670 = vmatprep.mubr.f32.mxu0 0.0
    %1671 = vmatmul.mubr.f32.gmra.mrb[0].mxu0 %v1278
    %v1672 = vpop.f32.mrb[0].mxu0
    %v1673 = vadd.f32 %v1576, %v1672
    %v1674 = vpop.f32.mrb[0].mxu0
    %1675 = vmatprep.mubr.f32.mxu0 0.0
    %1676 = vmatmul.mubr.f32.gmra.mrb[0].mxu0 %v1426
    %v1677 = vpop.f32.mrb[0].mxu0
    %v1678 = vadd.f32 %v1576, %v1677
    %v1679 = vpop.f32.mrb[0].mxu0
    %1680 = vmatprep.mubr.f32.mxu0 0.0
    %1681 = vmatmul.mubr.f32.gmra.mrb[0].mxu0 %v1579
    %v1682 = vpop.f32.mrb[0].mxu0
    %v1683 = vadd.f32 %v1576, %v1682
    %v1684 = vpop.f32.mrb[0].mxu0
    %1685 = vdwg.mxu0
    %1686 = vst.msk [vmem:[%s8] sm:$0xff] %vm61, %v43
    %1687 = vst.msk [vmem:[%s8 + $0x8] sm:$0xff] %vm61, %v1648
    %1688 = vst.msk [vmem:[%s8 + $0x10] sm:$0xff] %vm61, %v1653
    %1689 = vst.msk [vmem:[%s8 + $0x18] sm:$0xff] %vm61, %v1658
    %1690 = vst.msk [vmem:[%s8 + $0x20] sm:$0xff] %vm61, %v1663
    %1691 = vst.msk [vmem:[%s8 + $0x28] sm:$0xff] %vm61, %v1668
    %1692 = vst.msk [vmem:[%s8 + $0x30] sm:$0xff] %vm61, %v1673
    %1693 = vst.msk [vmem:[%s8 + $0x38] sm:$0xff] %vm61, %v1678
    %1694 = vst.msk [vmem:[%s8 + $0x40] sm:$0xff] %vm61, %v1683
    // Predicated region
    $region38: #{model_fnn_forward.1} parent=1 // pred_check
      _
    $region39: #{model_fnn_forward.1} parent=1 // pred_check_branch
      %1696 = sbr.rel (0) target = $region41
    $region40: #{model_fnn_forward.1} parent=1 // pred_region
      _
    $region41: #{model_fnn_forward.1} parent=1 // pred_fallthru
      _
    // Predicated region
    $region42: #{model_fnn_forward.1} parent=1 // pred_check
      _
    $region43: #{model_fnn_forward.1} parent=1 // pred_check_branch
      %1698 = sbr.rel (0) target = $region45
    $region44: #{model_fnn_forward.1} parent=1 // pred_region
      _
    $region45: #{model_fnn_forward.1} parent=1 // pred_fallthru
      _
    %1699 = vsyncpa [#allocation3], 1

</llo_original>
